<compile_context>
chip_gen: v6e
topology: v6e:2x2x1
jax: 0.10.0
libtpu: 0.0.40
codegen_flags: <defaults>
</compile_context>

<pallas_src>
import jax
import jax.numpy as jnp
import numpy as np
from jax.experimental import pallas as pl
from jax.experimental.pallas import tpu as pltpu


def _round_up(x, m):
    return ((x + m - 1) // m) * m


def _make_kernel(nlg, dp):
    def kernel(h_ref, ct_ref, u_ref, diag_ref, o_ref):
        # h_ref  : [1, Lp, Dp]       bf16 (ones column appended, mask folded in, zero padded)
        # ct_ref : [1, Dp, Lp]       bf16 (c^T, same augmentation)
        # u_ref  : [1, Dp, nlg*Dp]   bf16 (augmented biaffine, labels concatenated on lanes)
        # diag_ref: [Lp, Lp]         f32  (-inf on the diagonal, 0 elsewhere) -- resident
        # o_ref  : [1, nlg, Lp, Lp]  f32
        h = h_ref[0]
        ct = ct_ref[0]
        diag = diag_ref[...]

        # One lane-dense MXU matmul for all labels of this group.  Accumulate in
        # f32 inside the MXU, round to bf16 once for the second matmul.
        hu = jnp.dot(h, u_ref[0],
                     preferred_element_type=jnp.float32).astype(jnp.bfloat16)

        for n in range(nlg):                       # statically unrolled, small
            t = hu[:, n * dp:(n + 1) * dp]         # 128-aligned vreg slice
            # (h @ U'[n]) @ c^T  ==  biaffine + out_d + out_e + b   (all folded)
            e = jnp.dot(t, ct, preferred_element_type=jnp.float32)   # [Lp, Lp]
            o_ref[0, n] = e + diag                 # -inf diagonal, lane-dense store
    return kernel


def tree_crf_forward(input_h, input_c, W_d, W_e, U, b, mask=None):
    """Pallas TreeCRF forward. Returns energy [B, num_labels, L, L] (float32)."""
    B, L, D = input_h.shape
    NL = W_d.shape[0]
    LANE = 128
    Lp = _round_up(L, LANE)          # lane-dense output stores
    Dp = _round_up(D + 1, LANE)      # augmented (ones-column) contraction dim

    f32, bf16 = jnp.float32, jnp.bfloat16

    # ---- Augmented inputs: append ones column, fold the 0/1 mask, pad, cast bf16.
    ones = jnp.ones((B, L, 1), f32)
    h_aug = jnp.concatenate([input_h.astype(f32), ones], axis=-1)
    c_aug = jnp.concatenate([input_c.astype(f32), ones], axis=-1)
    if mask is not None:
        m = mask.astype(f32)[:, :, None]
        h_aug = h_aug * m            # mask_d on rows of the energy
        c_aug = c_aug * m            # mask_e on columns of the energy
    pad3 = ((0, 0), (0, Lp - L), (0, Dp - (D + 1)))
    h_aug = jnp.pad(h_aug, pad3).astype(bf16)                    # [B, Lp, Dp]
    c_t = jnp.swapaxes(jnp.pad(c_aug, pad3).astype(bf16), 1, 2)  # [B, Dp, Lp]

    # ---- Augmented biaffine parameter  U' = [[U, W_d^T], [W_e, b]]  per label.
    u_aug = jnp.zeros((NL, Dp, Dp), f32)
    u_aug = u_aug.at[:, :D, :D].set(U.astype(f32))
    u_aug = u_aug.at[:, :D, D].set(W_d.astype(f32))     # h . W_d  (decoder linear)
    u_aug = u_aug.at[:, D, :D].set(W_e.astype(f32))     # W_e . c  (encoder linear)
    u_aug = u_aug.at[:, D, D].set(b.astype(f32))        # bias

    # ---- Label grouping: fold as many labels per grid step as a VMEM budget
    #      allows (keeps the working set well under v7x's 32 MiB scoped default).
    per_label = (2 * Dp * Dp * 2          # U' slice, double-buffered bf16
                 + 2 * Lp * Lp * 4        # output slab, double-buffered f32
                 + Lp * Dp * 2            # HU intermediate share (bf16)
                 + Lp * Lp * 4)           # e temporary (f32)
    fixed = (2 * 2 * Lp * Dp * 2          # h + c^T, double-buffered bf16
             + 2 * Lp * Lp * 4            # diag, double-buffered f32
             + Lp * Dp * 2)               # slack
    budget = 12 * 1024 * 1024
    nlg = int(max(1, min(NL, (budget - fixed) // max(per_label, 1))))
    G = -(-NL // nlg)                # number of label groups (inner grid axis)
    NLp = G * nlg                    # labels padded to a whole number of groups

    u_pad = jnp.zeros((NLp, Dp, Dp), f32).at[:NL].set(u_aug)
    # [G, Dp, nlg*Dp]  with  u_cat[g, :, k*Dp:(k+1)*Dp] == U'[g*nlg + k]
    u_cat = jnp.transpose(u_pad.reshape(G, nlg, Dp, Dp), (0, 2, 1, 3))
    u_cat = u_cat.reshape(G, Dp, nlg * Dp).astype(bf16)

    # ---- Resident additive diagonal (-inf) mask, built once (constant index_map).
    diag_add = jnp.where(jnp.eye(Lp, dtype=bool), -jnp.inf, 0.0).astype(f32)

    grid = (B, G)                    # label-group axis innermost -> h/c^T/diag resident
    in_specs = [
        pl.BlockSpec((1, Lp, Dp), lambda bi, gi: (bi, 0, 0)),        # h_aug
        pl.BlockSpec((1, Dp, Lp), lambda bi, gi: (bi, 0, 0)),        # c^T
        pl.BlockSpec((1, Dp, nlg * Dp), lambda bi, gi: (gi, 0, 0)),  # U' (grouped)
        pl.BlockSpec((Lp, Lp), lambda bi, gi: (0, 0)),               # diag (resident)
    ]
    out_spec = pl.BlockSpec((1, nlg, Lp, Lp), lambda bi, gi: (bi, gi, 0, 0))
    out_shape = jax.ShapeDtypeStruct((B, NLp, Lp, Lp), f32)

    vmem_est = fixed + nlg * per_label
    cparams = pltpu.CompilerParams(
        dimension_semantics=("parallel", "parallel"),
        vmem_limit_bytes=int(min(max(2 * vmem_est, 16 * 2 ** 20), 32 * 2 ** 20)),
    )

    out_p = pl.pallas_call(
        _make_kernel(nlg, Dp),
        grid=grid,
        in_specs=in_specs,
        out_specs=out_spec,
        out_shape=out_shape,
        compiler_params=cparams,
    )(h_aug, c_t, u_cat, diag_add)

    # Slice off label / length padding (layout plumbing only).
    return out_p[:, :NL, :L, :L]


def tree_crf_reference(input_h, input_c, W_d, W_e, U, b, mask=None):
    """Pure-JAX f32 reference reproducing the PyTorch math directly."""
    out_d = jnp.einsum('nd,bid->bni', W_d, input_h)[..., None]          # [B,NL,L,1]
    out_e = jnp.einsum('nd,bjd->bnj', W_e, input_c)[:, :, None, :]      # [B,NL,1,L]
    bi = jnp.einsum('bip,npq,bjq->bnij', input_h, U, input_c)           # [B,NL,L,L]
    out = bi + out_d + out_e + b.reshape(1, -1, 1, 1)
    if mask is not None:
        out = out * mask[:, None, :, None] * mask[:, None, None, :]
    L = input_h.shape[1]
    diag = jnp.where(jnp.eye(L, dtype=bool), -jnp.inf, 0.0)
    return out + diag


# TODO(synk): TreeCRF.loss (matrix-tree partition via logdet of the Laplacian minor) has
# no clean Pallas equivalent and is not part of forward(); intentionally not implemented.


if __name__ == "__main__":
    B, L, D, NL = 2, 8, 32, 4  # batch, length, input_size, num_labels

    key = jax.random.PRNGKey(0)
    k_h, k_c, k_wd, k_we, k_u, k_m = jax.random.split(key, 6)

    input_h = jax.random.normal(k_h, (B, L, D), dtype=jnp.float32)
    input_c = jax.random.normal(k_c, (B, L, D), dtype=jnp.float32)

    # Deterministic xavier-uniform-style parameter init (matching the module's shapes).
    s_w = float(np.sqrt(6.0 / (NL + D)))
    s_u = float(np.sqrt(6.0 / (D + D)))
    W_d = jax.random.uniform(k_wd, (NL, D), minval=-s_w, maxval=s_w, dtype=jnp.float32)
    W_e = jax.random.uniform(k_we, (NL, D), minval=-s_w, maxval=s_w, dtype=jnp.float32)
    U = jax.random.uniform(k_u, (NL, D, D), minval=-s_u, maxval=s_u, dtype=jnp.float32)
    b = jnp.zeros((NL,), dtype=jnp.float32)  # nn.init.constant_(self.b, 0.)

    # Tolerances loosened vs. the f32 reference because the kernel feeds bf16 to the MXU.
    RTOL, ATOL = 5e-2, 2.5e-1

    # No-mask path (mask=None, as in the default forward call).
    out = tree_crf_forward(input_h, input_c, W_d, W_e, U, b, mask=None)
    out = jax.block_until_ready(out)
    ref = tree_crf_reference(input_h, input_c, W_d, W_e, U, b, mask=None)
    np.testing.assert_allclose(np.asarray(out), np.asarray(ref), rtol=RTOL, atol=ATOL)

    # Masked path.
    lengths = jnp.array([6, 8], dtype=jnp.int32)
    mask = (jnp.arange(L)[None, :] < lengths[:, None]).astype(jnp.float32)
    out_m = tree_crf_forward(input_h, input_c, W_d, W_e, U, b, mask=mask)
    out_m = jax.block_until_ready(out_m)
    ref_m = tree_crf_reference(input_h, input_c, W_d, W_e, U, b, mask=mask)
    np.testing.assert_allclose(np.asarray(out_m), np.asarray(ref_m), rtol=RTOL, atol=ATOL)

    print("KERNEL_OK")
</pallas_src>

<mosaic_0001>
module attributes {stable_mosaic.version = 11 : i64} {
  func.func @kernel(%arg0: i32, %arg1: i32, %arg2: memref<1x128x128xbf16, #tpu.memory_space<vmem>>, %arg3: memref<1x128x128xbf16, #tpu.memory_space<vmem>>, %arg4: memref<1x128x512xbf16, #tpu.memory_space<vmem>>, %arg5: memref<128x128xf32, #tpu.memory_space<vmem>>, %arg6: memref<1x4x128x128xf32, #tpu.memory_space<vmem>>) attributes {dimension_semantics = [#tpu.dimension_semantics<parallel>, #tpu.dimension_semantics<parallel>], iteration_bounds = array<i64: 2, 1>, scalar_prefetch = 0 : i64, scratch_operands = 0 : i64, tpu.core_type = #tpu.core_type<tc>, window_params = [{transform_indices = @transform_0, window_bounds = array<i64: 1, 128, 128>}, {transform_indices = @transform_1, window_bounds = array<i64: 1, 128, 128>}, {transform_indices = @transform_2, window_bounds = array<i64: 1, 128, 512>}, {pipeline_mode = #tpu.pipeline_mode<synchronous>, transform_indices = @transform_3, window_bounds = array<i64: 128, 128>}, {transform_indices = @transform_4, window_bounds = array<i64: 1, 4, 128, 128>}]} {
    %c0 = arith.constant 0 : index
    %c0_0 = arith.constant 0 : index
    %c0_1 = arith.constant 0 : index
    %0 = vector.load %arg2[%c0, %c0_0, %c0_1] : memref<1x128x128xbf16, #tpu.memory_space<vmem>>, vector<1x128x128xbf16>
    %1 = vector.shape_cast %0 : vector<1x128x128xbf16> to vector<128x128xbf16>
    %c0_2 = arith.constant 0 : index
    %c0_3 = arith.constant 0 : index
    %c0_4 = arith.constant 0 : index
    %2 = vector.load %arg3[%c0_2, %c0_3, %c0_4] : memref<1x128x128xbf16, #tpu.memory_space<vmem>>, vector<1x128x128xbf16>
    %3 = vector.shape_cast %2 : vector<1x128x128xbf16> to vector<128x128xbf16>
    %c0_5 = arith.constant 0 : index
    %c0_6 = arith.constant 0 : index
    %4 = vector.load %arg5[%c0_5, %c0_6] : memref<128x128xf32, #tpu.memory_space<vmem>>, vector<128x128xf32>
    %c0_7 = arith.constant 0 : index
    %c0_8 = arith.constant 0 : index
    %c0_9 = arith.constant 0 : index
    %5 = vector.load %arg4[%c0_7, %c0_8, %c0_9] : memref<1x128x512xbf16, #tpu.memory_space<vmem>>, vector<1x128x512xbf16>
    %6 = vector.shape_cast %5 : vector<1x128x512xbf16> to vector<128x512xbf16>
    %cst = arith.constant dense<0.000000e+00> : vector<128x512xf32>
    %7 = tpu.matmul %1, %6, %cst {dimension_numbers = #tpu.dot_dimension_numbers<[1], [0], [0], [1], [0, 0, 1, 1], [], []>} : vector<128x128xbf16>, vector<128x512xbf16>, vector<128x512xf32> -> vector<128x512xf32>
    %8 = arith.truncf %7 : vector<128x512xf32> to vector<128x512xbf16>
    %9 = vector.extract_strided_slice %8 {offsets = [0, 0], sizes = [128, 128], strides = [1, 1]} : vector<128x512xbf16> to vector<128x128xbf16>
    %cst_10 = arith.constant dense<0.000000e+00> : vector<128x128xf32>
    %10 = tpu.matmul %9, %3, %cst_10 {dimension_numbers = #tpu.dot_dimension_numbers<[1], [0], [0], [1], [0, 0, 1, 1], [], []>} : vector<128x128xbf16>, vector<128x128xbf16>, vector<128x128xf32> -> vector<128x128xf32>
    %11 = arith.addf %10, %4 : vector<128x128xf32>
    %c0_11 = arith.constant 0 : index
    %c0_12 = arith.constant 0 : index
    %c0_13 = arith.constant 0 : index
    %c0_14 = arith.constant 0 : index
    %12 = vector.load %arg6[%c0_11, %c0_12, %c0_13, %c0_14] : memref<1x4x128x128xf32, #tpu.memory_space<vmem>>, vector<1x1x128x128xf32>
    %13 = vector.shape_cast %12 : vector<1x1x128x128xf32> to vector<128x128xf32>
    %14 = vector.shape_cast %11 : vector<128x128xf32> to vector<1x1x128x128xf32>
    tpu.vector_store %arg6[%c0_11, %c0_12, %c0_13, %c0_14], %14 {strides = array<i32>} : memref<1x4x128x128xf32, #tpu.memory_space<vmem>>, vector<1x1x128x128xf32>,
    %15 = vector.extract_strided_slice %8 {offsets = [0, 128], sizes = [128, 128], strides = [1, 1]} : vector<128x512xbf16> to vector<128x128xbf16>
    %cst_15 = arith.constant dense<0.000000e+00> : vector<128x128xf32>
    %16 = tpu.matmul %15, %3, %cst_15 {dimension_numbers = #tpu.dot_dimension_numbers<[1], [0], [0], [1], [0, 0, 1, 1], [], []>} : vector<128x128xbf16>, vector<128x128xbf16>, vector<128x128xf32> -> vector<128x128xf32>
    %17 = arith.addf %16, %4 : vector<128x128xf32>
    %c0_16 = arith.constant 0 : index
    %c1 = arith.constant 1 : index
    %c0_17 = arith.constant 0 : index
    %c0_18 = arith.constant 0 : index
    %18 = vector.load %arg6[%c0_16, %c1, %c0_17, %c0_18] : memref<1x4x128x128xf32, #tpu.memory_space<vmem>>, vector<1x1x128x128xf32>
    %19 = vector.shape_cast %18 : vector<1x1x128x128xf32> to vector<128x128xf32>
    %20 = vector.shape_cast %17 : vector<128x128xf32> to vector<1x1x128x128xf32>
    tpu.vector_store %arg6[%c0_16, %c1, %c0_17, %c0_18], %20 {strides = array<i32>} : memref<1x4x128x128xf32, #tpu.memory_space<vmem>>, vector<1x1x128x128xf32>,
    %21 = vector.extract_strided_slice %8 {offsets = [0, 256], sizes = [128, 128], strides = [1, 1]} : vector<128x512xbf16> to vector<128x128xbf16>
    %cst_19 = arith.constant dense<0.000000e+00> : vector<128x128xf32>
    %22 = tpu.matmul %21, %3, %cst_19 {dimension_numbers = #tpu.dot_dimension_numbers<[1], [0], [0], [1], [0, 0, 1, 1], [], []>} : vector<128x128xbf16>, vector<128x128xbf16>, vector<128x128xf32> -> vector<128x128xf32>
    %23 = arith.addf %22, %4 : vector<128x128xf32>
    %c0_20 = arith.constant 0 : index
    %c2 = arith.constant 2 : index
    %c0_21 = arith.constant 0 : index
    %c0_22 = arith.constant 0 : index
    %24 = vector.load %arg6[%c0_20, %c2, %c0_21, %c0_22] : memref<1x4x128x128xf32, #tpu.memory_space<vmem>>, vector<1x1x128x128xf32>
    %25 = vector.shape_cast %24 : vector<1x1x128x128xf32> to vector<128x128xf32>
    %26 = vector.shape_cast %23 : vector<128x128xf32> to vector<1x1x128x128xf32>
    tpu.vector_store %arg6[%c0_20, %c2, %c0_21, %c0_22], %26 {strides = array<i32>} : memref<1x4x128x128xf32, #tpu.memory_space<vmem>>, vector<1x1x128x128xf32>,
    %27 = vector.extract_strided_slice %8 {offsets = [0, 384], sizes = [128, 128], strides = [1, 1]} : vector<128x512xbf16> to vector<128x128xbf16>
    %cst_23 = arith.constant dense<0.000000e+00> : vector<128x128xf32>
    %28 = tpu.matmul %27, %3, %cst_23 {dimension_numbers = #tpu.dot_dimension_numbers<[1], [0], [0], [1], [0, 0, 1, 1], [], []>} : vector<128x128xbf16>, vector<128x128xbf16>, vector<128x128xf32> -> vector<128x128xf32>
    %29 = arith.addf %28, %4 : vector<128x128xf32>
    %c0_24 = arith.constant 0 : index
    %c3 = arith.constant 3 : index
    %c0_25 = arith.constant 0 : index
    %c0_26 = arith.constant 0 : index
    %30 = vector.load %arg6[%c0_24, %c3, %c0_25, %c0_26] : memref<1x4x128x128xf32, #tpu.memory_space<vmem>>, vector<1x1x128x128xf32>
    %31 = vector.shape_cast %30 : vector<1x1x128x128xf32> to vector<128x128xf32>
    %32 = vector.shape_cast %29 : vector<128x128xf32> to vector<1x1x128x128xf32>
    tpu.vector_store %arg6[%c0_24, %c3, %c0_25, %c0_26], %32 {strides = array<i32>} : memref<1x4x128x128xf32, #tpu.memory_space<vmem>>, vector<1x1x128x128xf32>,
    return
  }
  func.func @transform_0(%arg0: i32, %arg1: i32) -> (i32, i32, i32) {
    %c0_i32 = arith.constant 0 : i32
    %c0_i32_0 = arith.constant 0 : i32
    %c0_i32_1 = arith.constant 0 : i32
    return %arg0, %c0_i32, %c0_i32_0 : i32, i32, i32
  }
  func.func @transform_1(%arg0: i32, %arg1: i32) -> (i32, i32, i32) {
    %c0_i32 = arith.constant 0 : i32
    %c0_i32_0 = arith.constant 0 : i32
    %c0_i32_1 = arith.constant 0 : i32
    return %arg0, %c0_i32, %c0_i32_0 : i32, i32, i32
  }
  func.func @transform_2(%arg0: i32, %arg1: i32) -> (i32, i32, i32) {
    %c0_i32 = arith.constant 0 : i32
    %c0_i32_0 = arith.constant 0 : i32
    %c0_i32_1 = arith.constant 0 : i32
    return %arg1, %c0_i32, %c0_i32_0 : i32, i32, i32
  }
  func.func @transform_3(%arg0: i32, %arg1: i32) -> (i32, i32) {
    %c0_i32 = arith.constant 0 : i32
    %c0_i32_0 = arith.constant 0 : i32
    %c0_i32_1 = arith.constant 0 : i32
    return %c0_i32, %c0_i32_0 : i32, i32
  }
  func.func @transform_4(%arg0: i32, %arg1: i32) -> (i32, i32, i32, i32) {
    %c0_i32 = arith.constant 0 : i32
    %c0_i32_0 = arith.constant 0 : i32
    %c0_i32_1 = arith.constant 0 : i32
    return %arg0, %arg1, %c0_i32, %c0_i32_0 : i32, i32, i32, i32
  }
}

</mosaic_0001>

<llo_original>
// kernel: tpu_custom_call.1
$region0: #{tpu_custom_call.1}
  #allocation0 [shape = 'u32[]', space=smem, size = 0x4, offset = 0x4, fixed_abs, tag = 'smem constant byte address 0x4 - core index']
  #allocation1 [shape = 'u32[144,128]{1,0:T(1,128)}', space=vmem, size = 0x12000, scoped, tag = 'internal scratch']
  %s0 = inlined_call_operand.hbm [shape: bf16[2,128,128], index: 0, kind: input, shape index: {}]
  %s1 = inlined_call_operand.hbm [shape: bf16[2,128,128], index: 1, kind: input, shape index: {}]
  %s2 = inlined_call_operand.hbm [shape: bf16[1,128,512], index: 2, kind: input, shape index: {}]
  %s3 = inlined_call_operand.hbm [shape: f32[128,128], index: 3, kind: input, shape index: {}]
  %s4 = inlined_call_operand.hbm [shape: f32[2,4,128,128], index: 4, kind: output, shape index: {}]
  %s5 = sld [smem:[#allocation0]]
  $region65: #{tpu_custom_call.1} parent=0
    _
  %s7 = ssub.s32 1, %s5
  %s8 = scalar_select 0, %s7, %s5
  $region1: #{tpu_custom_call.1} parent=0
    #allocation2 [shape = 'u8[65536]{0}', space=vmem, size = 0x10000, scoped, tag = 'input window, operand 0']
    #allocation3 [shape = 's32[2]{0}', space=sflag, size = 0x8, scoped, tag = 'scoped memory for tpu_custom_call.1']
    #allocation4 [shape = 's32[2]{0}', space=sflag, size = 0x8, scoped, tag = 'scoped memory for tpu_custom_call.1']
    #allocation5 [shape = 'u8[65536]{0}', space=vmem, size = 0x10000, scoped, tag = 'input window, operand 1']
    #allocation6 [shape = 's32[2]{0}', space=sflag, size = 0x8, scoped, tag = 'scoped memory for tpu_custom_call.1']
    #allocation7 [shape = 'u8[131072]{0}', space=vmem, size = 0x20000, scoped, tag = 'input window, operand 2, single buffered']
    #allocation8 [shape = 'u8[65536]{0}', space=vmem, size = 0x10000, scoped, tag = 'input window, operand 3, single buffered']
    #allocation9 [shape = 's32[1]{0}', space=sflag, size = 0x4, scoped, tag = 'scoped memory for tpu_custom_call.1']
    #allocation10 [shape = 'u8[524288]{0}', space=vmem, size = 0x80000, scoped, tag = 'output window, operand 0']
    %9 = vsyncpa [#allocation3], 0
    %s10 = scalar_lea.sflag [#allocation3], 1
    %11 = vsyncpa %s10, 0
    %12 = vsyncpa [#allocation6], 0
    %s13 = scalar_lea.sflag [#allocation6], 1
    %14 = vsyncpa %s13, 0
    %15 = vsyncpa [#allocation9], 0
    %16 = vsyncpa [#allocation4], 0
    %s17 = scalar_lea.sflag [#allocation4], 1
    %18 = vsyncpa %s17, 0
    loop: start=0, step=1, limit=4
    $region2: #{tpu_custom_call.1} parent=1 // loop_pre_header
      _
    $region3: #{tpu_custom_call.1} parent=1 // loop_header
      %s20 = sphi 0, %s24
      %p21 = scmp.ge.s32.totalorder %s20, 4
      %s27 = sphi 0, %s39
      %s28 = sphi 0, %s35
      %s29 = sphi 0, %s27
      %s30 = sphi 0, %s28
      %s31 = sphi 0, %s29
      %s32 = sphi 0, %s30
      %s42 = sphi 0, %s44
      %s45 = sphi 0, %s42
      %s46 = sphi 0, %s45
      %s62 = sphi 0, %s46
      %s68 = sphi 0, %s70
      %s71 = sphi 0, %s68
      %s72 = sphi 0, %s71
      %s88 = sphi 0, %s72
      %s94 = sphi 0, %s96
      %s97 = sphi 0, %s94
      %s98 = sphi 0, %s97
      %s114 = sphi 0, %s98
      %s118 = sphi 0, %s118
      %s120 = sphi 0, %s118
      %s121 = sphi 0, %s120
      %s135 = sphi 0, %s121
      %s143 = sphi 0, %s145
      %s146 = sphi 0, %s143
      %s147 = sphi 0, %s146
      %s163 = sphi 0, %s147
    $region4: #{tpu_custom_call.1} parent=1 // loop_header_branch
      %23 = sbr.rel (%p21) target = $region8
    $region5: #{tpu_custom_call.1} parent=1 // loop_body
      %s25 = ssub.s32 %s20, 1
      %s26 = ssub.s32 %s20, 2
      %s33 = sadd.s32 1, %s28
      %p34 = scmp.ge.s32.totalorder %s33, 1
      %s35 = scalar_select %p34, 0, %s33
      %s36 = sadd.s32 1, %s27
      %s37 = scalar_select %p34, %s36, %s27
      %p38 = scmp.ge.s32.totalorder %s37, 2
      %s39 = scalar_select %p38, 0, %s37
      %s40 = ssub.s32 %s27, %s39
      %p41 = scmp.eq.s32.totalorder %s40, 0
      %s43 = sadd.s32 %s42, 1
      %s44 = scalar_select %p41, %s42, %s43
      %p47 = pneg %p41
      %p48 = scmp.eq.s32.totalorder %s20, 1
      %p49 = por %p47, %p48
      %p50 = scmp.ne.s32.totalorder %s42, %s45
      %p51 = scmp.eq.s32.totalorder %s20, 0
      %p52 = por %p50, %p51
      %p53 = scmp.ne.s32.totalorder %s42, %s45
      %p54 = scmp.eq.s32.totalorder %s25, 1
      %p55 = por %p53, %p54
      %p56 = scmp.ne.s32.totalorder %s45, %s46
      %p57 = scmp.eq.s32.totalorder %s25, 0
      %p58 = por %p56, %p57
      %p59 = scmp.ne.s32.totalorder %s45, %s46
      %p60 = scmp.eq.s32.totalorder %s26, 1
      %p61 = por %p59, %p60
      %p63 = scmp.ne.s32.totalorder %s46, %s62
      %p64 = scmp.eq.s32.totalorder %s26, 0
      %p65 = por %p63, %p64
      %s66 = ssub.s32 %s27, %s39
      %p67 = scmp.eq.s32.totalorder %s66, 0
      %s69 = sadd.s32 %s68, 1
      %s70 = scalar_select %p67, %s68, %s69
      %p73 = pneg %p67
      %p74 = scmp.eq.s32.totalorder %s20, 1
      %p75 = por %p73, %p74
      %p76 = scmp.ne.s32.totalorder %s68, %s71
      %p77 = scmp.eq.s32.totalorder %s20, 0
      %p78 = por %p76, %p77
      %p79 = scmp.ne.s32.totalorder %s68, %s71
      %p80 = scmp.eq.s32.totalorder %s25, 1
      %p81 = por %p79, %p80
      %p82 = scmp.ne.s32.totalorder %s71, %s72
      %p83 = scmp.eq.s32.totalorder %s25, 0
      %p84 = por %p82, %p83
      %p85 = scmp.ne.s32.totalorder %s71, %s72
      %p86 = scmp.eq.s32.totalorder %s26, 1
      %p87 = por %p85, %p86
      %p89 = scmp.ne.s32.totalorder %s72, %s88
      %p90 = scmp.eq.s32.totalorder %s26, 0
      %p91 = por %p89, %p90
      %s92 = ssub.s32 %s28, %s35
      %p93 = scmp.eq.s32.totalorder %s92, 0
      %s95 = sadd.s32 %s94, 1
      %s96 = scalar_select %p93, %s94, %s95
      %p99 = pneg %p93
      %p100 = scmp.eq.s32.totalorder %s20, 1
      %p101 = por %p99, %p100
      %p102 = scmp.ne.s32.totalorder %s94, %s97
      %p103 = scmp.eq.s32.totalorder %s20, 0
      %p104 = por %p102, %p103
      %p105 = scmp.ne.s32.totalorder %s94, %s97
      %p106 = scmp.eq.s32.totalorder %s25, 1
      %p107 = por %p105, %p106
      %p108 = scmp.ne.s32.totalorder %s97, %s98
      %p109 = scmp.eq.s32.totalorder %s25, 0
      %p110 = por %p108, %p109
      %p111 = scmp.ne.s32.totalorder %s97, %s98
      %p112 = scmp.eq.s32.totalorder %s26, 1
      %p113 = por %p111, %p112
      %p115 = scmp.ne.s32.totalorder %s98, %s114
      %p116 = scmp.eq.s32.totalorder %s26, 0
      %p117 = por %p115, %p116
      %s119 = sadd.s32 %s118, 1
      %p122 = scmp.eq.s32.totalorder %s20, 1
      %p123 = scmp.ne.s32.totalorder %s118, %s120
      %p124 = scmp.eq.s32.totalorder %s20, 0
      %p125 = por %p123, %p124
      %p126 = scmp.ne.s32.totalorder %s118, %s120
      %p127 = scmp.eq.s32.totalorder %s25, 1
      %p128 = por %p126, %p127
      %p129 = scmp.ne.s32.totalorder %s120, %s121
      %p130 = scmp.eq.s32.totalorder %s25, 0
      %p131 = por %p129, %p130
      %p132 = scmp.ne.s32.totalorder %s120, %s121
      %p133 = scmp.eq.s32.totalorder %s26, 1
      %p134 = por %p132, %p133
      %p136 = scmp.ne.s32.totalorder %s121, %s135
      %p137 = scmp.eq.s32.totalorder %s26, 0
      %p138 = por %p136, %p137
      %s139 = ssub.s32 %s27, %s39
      %s140 = ssub.s32 %s28, %s35
      %s141 = sor.u32 %s139, %s140
      %p142 = scmp.eq.s32.totalorder %s141, 0
      %s144 = sadd.s32 %s143, 1
      %s145 = scalar_select %p142, %s143, %s144
      %p148 = pneg %p142
      %p149 = scmp.eq.s32.totalorder %s20, 1
      %p150 = por %p148, %p149
      %p151 = scmp.ne.s32.totalorder %s143, %s146
      %p152 = scmp.eq.s32.totalorder %s20, 0
      %p153 = por %p151, %p152
      %p154 = scmp.ne.s32.totalorder %s143, %s146
      %p155 = scmp.eq.s32.totalorder %s25, 1
      %p156 = por %p154, %p155
      %p157 = scmp.ne.s32.totalorder %s146, %s147
      %p158 = scmp.eq.s32.totalorder %s25, 0
      %p159 = por %p157, %p158
      %p160 = scmp.ne.s32.totalorder %s146, %s147
      %p161 = scmp.eq.s32.totalorder %s26, 1
      %p162 = por %p160, %p161
      %p164 = scmp.ne.s32.totalorder %s147, %s163
      %p165 = scmp.eq.s32.totalorder %s26, 0
      %p166 = por %p164, %p165
      %p167 = scmp.le.s32.totalorder 1, %s20
      %p168 = scmp.lt.s32.totalorder %s20, 3
      %p169 = pnand %p167, %p168
      %p170 = pneg %p169
      // Predicated region
      $region9: #{tpu_custom_call.1} parent=5 // pred_check
        _
      $region10: #{tpu_custom_call.1} parent=5 // pred_check_branch
        %172 = sbr.rel (%p169) target = $region12
      $region11: #{tpu_custom_call.1} parent=5 // pred_region
        %s173 = ssub.s32 %s20, 1
        // Predicated region
        $region13: #{tpu_custom_call.1} parent=11 // pred_check
          %p174 = pneg %p110
        $region14: #{tpu_custom_call.1} parent=11 // pred_check_branch
          %176 = sbr.rel (%p174) target = $region16
        $region15: #{tpu_custom_call.1} parent=11 // pred_region
          %s178 = ssub.s32 4096, 4096
          %179 = vsyncadd [#allocation6], %s178
          %s180 = smul.addr %s30, 64
          %s181 = smul.addr %s180, 64
          %s182 = scalar_lea.hbm %s2, %s181
          %s183 = sshll.u32 [#allocation7], 4
          %s184 = int_to_ptr.vmem [resolvable:$true] %s183
          %189 = dma.hbm_to_vmem [thread:$0]  %s182, 4096, %s184, [#allocation6], 256, 256, 16
        $region16: #{tpu_custom_call.1} parent=11 // pred_fallthru
          _
        // Predicated region
        $region17: #{tpu_custom_call.1} parent=11 // pred_check
          %p190 = pneg %p131
        $region18: #{tpu_custom_call.1} parent=11 // pred_check_branch
          %192 = sbr.rel (%p190) target = $region20
        $region19: #{tpu_custom_call.1} parent=11 // pred_region
          %s194 = ssub.s32 2048, 2048
          %195 = vsyncadd [#allocation9], %s194
          %s196 = sshll.u32 [#allocation8], 4
          %s197 = int_to_ptr.vmem [resolvable:$true] %s196
          %202 = dma.hbm_to_vmem [thread:$0]  %s3, 2048, %s197, [#allocation9], 128, 128, 8
        $region20: #{tpu_custom_call.1} parent=11 // pred_fallthru
          _
      $region12: #{tpu_custom_call.1} parent=5 // pred_fallthru
        _
      %p203 = scmp.lt.s32.totalorder %s20, 2
      // Predicated region
      $region21: #{tpu_custom_call.1} parent=5 // pred_check
        %p204 = pneg %p203
      $region22: #{tpu_custom_call.1} parent=5 // pred_check_branch
        %206 = sbr.rel (%p204) target = $region24
      $region23: #{tpu_custom_call.1} parent=5 // pred_region
        // Predicated region
        $region25: #{tpu_custom_call.1} parent=23 // pred_check
          %p207 = pneg %p52
        $region26: #{tpu_custom_call.1} parent=23 // pred_check_branch
          %209 = sbr.rel (%p207) target = $region28
        $region27: #{tpu_custom_call.1} parent=23 // pred_region
          %s210 = sand.u32 %s42, 1
          %s211 = scalar_lea.sflag [#allocation3], %s210
          %s212 = sand.u32 %s42, 1
          %s213 = smul.addr %s212, 64
          %s214 = scalar_lea.vmem [#allocation2], %s213
          %s216 = ssub.s32 1024, 1024
          %217 = vsyncadd %s211, %s216
          %s218 = smul.addr %s27, 16
          %s219 = smul.addr %s218, 64
          %s220 = scalar_lea.hbm %s0, %s219
          %s221 = sshll.u32 %s214, 4
          %s222 = int_to_ptr.vmem [resolvable:$true] %s221
          %227 = dma.hbm_to_vmem [thread:$0]  %s220, 1024, %s222, %s211, 64, 64, 4
        $region28: #{tpu_custom_call.1} parent=23 // pred_fallthru
          _
        // Predicated region
        $region29: #{tpu_custom_call.1} parent=23 // pred_check
          %p228 = pneg %p78
        $region30: #{tpu_custom_call.1} parent=23 // pred_check_branch
          %230 = sbr.rel (%p228) target = $region32
        $region31: #{tpu_custom_call.1} parent=23 // pred_region
          %s231 = sand.u32 %s20, 1
          %s232 = scalar_lea.sflag [#allocation6], %s231
          %s233 = sand.u32 %s68, 1
          %s234 = smul.addr %s233, 64
          %s235 = scalar_lea.vmem [#allocation5], %s234
          %s237 = ssub.s32 1024, 1024
          %238 = vsyncadd %s232, %s237
          %s239 = smul.addr %s27, 16
          %s240 = smul.addr %s239, 64
          %s241 = scalar_lea.hbm %s1, %s240
          %s242 = sshll.u32 %s235, 4
          %s243 = int_to_ptr.vmem [resolvable:$true] %s242
          %248 = dma.hbm_to_vmem [thread:$0]  %s241, 1024, %s243, %s232, 64, 64, 4
        $region32: #{tpu_custom_call.1} parent=23 // pred_fallthru
          _
      $region24: #{tpu_custom_call.1} parent=5 // pred_fallthru
        _
      %p249 = scmp.le.s32.totalorder 1, %s20
      %p250 = scmp.lt.s32.totalorder %s20, 3
      %p251 = pnand %p249, %p250
      %p252 = pneg %p251
      // Predicated region
      $region33: #{tpu_custom_call.1} parent=5 // pred_check
        _
      $region34: #{tpu_custom_call.1} parent=5 // pred_check_branch
        %254 = sbr.rel (%p251) target = $region36
      $region35: #{tpu_custom_call.1} parent=5 // pred_region
        %s255 = ssub.s32 %s20, 1
        %s256 = sand.u32 %s45, 1
        %s257 = scalar_lea.sflag [#allocation3], %s256
        %s258 = sand.u32 %s45, 1
        %s259 = smul.addr %s258, 64
        %s260 = scalar_lea.vmem [#allocation2], %s259
        // Predicated region
        $region37: #{tpu_custom_call.1} parent=35 // pred_check
          %p261 = pneg %p58
        $region38: #{tpu_custom_call.1} parent=35 // pred_check_branch
          %263 = sbr.rel (%p261) target = $region40
        $region39: #{tpu_custom_call.1} parent=35 // pred_region
          %264 = dma.done %s257, 1024
        $region40: #{tpu_custom_call.1} parent=35 // pred_fallthru
          _
        %s265 = sand.u32 %s25, 1
        %s266 = scalar_lea.sflag [#allocation6], %s265
        %s267 = sand.u32 %s71, 1
        %s268 = smul.addr %s267, 64
        %s269 = scalar_lea.vmem [#allocation5], %s268
        // Predicated region
        $region41: #{tpu_custom_call.1} parent=35 // pred_check
          %p270 = pneg %p84
        $region42: #{tpu_custom_call.1} parent=35 // pred_check_branch
          %272 = sbr.rel (%p270) target = $region44
        $region43: #{tpu_custom_call.1} parent=35 // pred_region
          %273 = dma.done %s266, 1024
        $region44: #{tpu_custom_call.1} parent=35 // pred_fallthru
          _
        // Predicated region
        $region45: #{tpu_custom_call.1} parent=35 // pred_check
          %p274 = pneg %p110
        $region46: #{tpu_custom_call.1} parent=35 // pred_check_branch
          %276 = sbr.rel (%p274) target = $region48
        $region47: #{tpu_custom_call.1} parent=35 // pred_region
          %277 = dma.done [#allocation6], 4096
        $region48: #{tpu_custom_call.1} parent=35 // pred_fallthru
          _
        // Predicated region
        $region49: #{tpu_custom_call.1} parent=35 // pred_check
          %p278 = pneg %p131
        $region50: #{tpu_custom_call.1} parent=35 // pred_check_branch
          %280 = sbr.rel (%p278) target = $region52
        $region51: #{tpu_custom_call.1} parent=35 // pred_region
          %281 = dma.done [#allocation9], 2048
        $region52: #{tpu_custom_call.1} parent=35 // pred_fallthru
          _
        %s282 = sand.u32 %s45, 1
        %s283 = scalar_lea.sflag [#allocation3], %s282
        %s284 = sand.u32 %s45, 1
        %s285 = smul.addr %s284, 64
        %s286 = scalar_lea.vmem [#allocation2], %s285
        %p287 = pneg %p58
        %p288 = pneg %p55
        %s289 = sand.u32 %s25, 1
        %s290 = scalar_lea.sflag [#allocation6], %s289
        %s291 = sand.u32 %s71, 1
        %s292 = smul.addr %s291, 64
        %s293 = scalar_lea.vmem [#allocation5], %s292
        %p294 = pneg %p84
        %p295 = pneg %p81
        %p296 = pneg %p110
        %p297 = pneg %p107
        %p298 = pneg %p131
        %p299 = pneg %p128
        %p300 = pneg %p159
        %p301 = pneg %p156
        %s302 = sand.u32 %s146, 1
        %s303 = scalar_lea.sflag [#allocation4], %s302
        %s304 = sand.u32 %s146, 1
        %s305 = smul.addr %s304, 512
        %s306 = scalar_lea.vmem [#allocation10], %s305
        %s307 = smul.u32 4, %s30
        %v309 = vld [vmem:[%s260] sm:$0xf]
        %v310 = vld [vmem:[%s260 + $0x4] sm:$0xf]
        %v311 = vld [vmem:[%s260 + $0x8] sm:$0xf]
        %v312 = vld [vmem:[%s260 + $0xc] sm:$0xf]
        %v313 = vld [vmem:[%s260 + $0x10] sm:$0xf]
        %v314 = vld [vmem:[%s260 + $0x14] sm:$0xf]
        %v315 = vld [vmem:[%s260 + $0x18] sm:$0xf]
        %v316 = vld [vmem:[%s260 + $0x1c] sm:$0xf]
        %v317 = vld [vmem:[%s260 + $0x20] sm:$0xf]
        %v318 = vld [vmem:[%s260 + $0x24] sm:$0xf]
        %v319 = vld [vmem:[%s260 + $0x28] sm:$0xf]
        %v320 = vld [vmem:[%s260 + $0x2c] sm:$0xf]
        %v321 = vld [vmem:[%s260 + $0x30] sm:$0xf]
        %v322 = vld [vmem:[%s260 + $0x34] sm:$0xf]
        %v323 = vld [vmem:[%s260 + $0x38] sm:$0xf]
        %v324 = vld [vmem:[%s260 + $0x3c] sm:$0xf]
        %v325 = vld [vmem:[%s269] sm:$0xf]
        %v326 = vld [vmem:[%s269 + $0x4] sm:$0xf]
        %v327 = vld [vmem:[%s269 + $0x8] sm:$0xf]
        %v328 = vld [vmem:[%s269 + $0xc] sm:$0xf]
        %v329 = vld [vmem:[%s269 + $0x10] sm:$0xf]
        %v330 = vld [vmem:[%s269 + $0x14] sm:$0xf]
        %v331 = vld [vmem:[%s269 + $0x18] sm:$0xf]
        %v332 = vld [vmem:[%s269 + $0x1c] sm:$0xf]
        %v333 = vld [vmem:[%s269 + $0x20] sm:$0xf]
        %v334 = vld [vmem:[%s269 + $0x24] sm:$0xf]
        %v335 = vld [vmem:[%s269 + $0x28] sm:$0xf]
        %v336 = vld [vmem:[%s269 + $0x2c] sm:$0xf]
        %v337 = vld [vmem:[%s269 + $0x30] sm:$0xf]
        %v338 = vld [vmem:[%s269 + $0x34] sm:$0xf]
        %v339 = vld [vmem:[%s269 + $0x38] sm:$0xf]
        %v340 = vld [vmem:[%s269 + $0x3c] sm:$0xf]
        %v341 = vld [vmem:[#allocation8] sm:$0xff]
        %v342 = vld [vmem:[#allocation8 + $0x8] sm:$0xff]
        %v343 = vld [vmem:[#allocation8 + $0x10] sm:$0xff]
        %v344 = vld [vmem:[#allocation8 + $0x18] sm:$0xff]
        %v345 = vld [vmem:[#allocation8 + $0x20] sm:$0xff]
        %v346 = vld [vmem:[#allocation8 + $0x28] sm:$0xff]
        %v347 = vld [vmem:[#allocation8 + $0x30] sm:$0xff]
        %v348 = vld [vmem:[#allocation8 + $0x38] sm:$0xff]
        %v349 = vld [vmem:[#allocation8 + $0x40] sm:$0xff]
        %v350 = vld [vmem:[#allocation8 + $0x48] sm:$0xff]
        %v351 = vld [vmem:[#allocation8 + $0x50] sm:$0xff]
        %v352 = vld [vmem:[#allocation8 + $0x58] sm:$0xff]
        %v353 = vld [vmem:[#allocation8 + $0x60] sm:$0xff]
        %v354 = vld [vmem:[#allocation8 + $0x68] sm:$0xff]
        %v355 = vld [vmem:[#allocation8 + $0x70] sm:$0xff]
        %v356 = vld [vmem:[#allocation8 + $0x78] sm:$0xff]
        %v357 = vld [vmem:[#allocation7] sm:$0xff]
        %v358 = vld [vmem:[#allocation7 + $0x8] sm:$0xff]
        %v359 = vld [vmem:[#allocation7 + $0x10] sm:$0xff]
        %v360 = vld [vmem:[#allocation7 + $0x18] sm:$0xff]
        %v361 = vld [vmem:[#allocation7 + $0x20] sm:$0xff]
        %v362 = vld [vmem:[#allocation7 + $0x28] sm:$0xff]
        %v363 = vld [vmem:[#allocation7 + $0x30] sm:$0xff]
        %v364 = vld [vmem:[#allocation7 + $0x38] sm:$0xff]
        %v365 = vld [vmem:[#allocation7 + $0x40] sm:$0xff]
        %v366 = vld [vmem:[#allocation7 + $0x48] sm:$0xff]
        %v367 = vld [vmem:[#allocation7 + $0x50] sm:$0xff]
        %v368 = vld [vmem:[#allocation7 + $0x58] sm:$0xff]
        %v369 = vld [vmem:[#allocation7 + $0x60] sm:$0xff]
        %v370 = vld [vmem:[#allocation7 + $0x68] sm:$0xff]
        %v371 = vld [vmem:[#allocation7 + $0x70] sm:$0xff]
        %v372 = vld [vmem:[#allocation7 + $0x78] sm:$0xff]
        %v373 = vld [vmem:[#allocation7 + $0x80] sm:$0xff]
        %v374 = vld [vmem:[#allocation7 + $0x88] sm:$0xff]
        %v375 = vld [vmem:[#allocation7 + $0x90] sm:$0xff]
        %v376 = vld [vmem:[#allocation7 + $0x98] sm:$0xff]
        %v377 = vld [vmem:[#allocation7 + $0xa0] sm:$0xff]
        %v378 = vld [vmem:[#allocation7 + $0xa8] sm:$0xff]
        %v379 = vld [vmem:[#allocation7 + $0xb0] sm:$0xff]
        %v380 = vld [vmem:[#allocation7 + $0xb8] sm:$0xff]
        %v381 = vld [vmem:[#allocation7 + $0xc0] sm:$0xff]
        %v382 = vld [vmem:[#allocation7 + $0xc8] sm:$0xff]
        %v383 = vld [vmem:[#allocation7 + $0xd0] sm:$0xff]
        %v384 = vld [vmem:[#allocation7 + $0xd8] sm:$0xff]
        %v385 = vld [vmem:[#allocation7 + $0xe0] sm:$0xff]
        %v386 = vld [vmem:[#allocation7 + $0xe8] sm:$0xff]
        %v387 = vld [vmem:[#allocation7 + $0xf0] sm:$0xff]
        %v388 = vld [vmem:[#allocation7 + $0xf8] sm:$0xff]
        %v405 = vunpack.c.l.b16 %v309
        %v406 = vunpack.c.l.b16 %v310
        %v407 = vunpack.c.l.b16 %v311
        %v408 = vunpack.c.l.b16 %v312
        %v409 = vunpack.c.l.b16 %v313
        %v410 = vunpack.c.l.b16 %v314
        %v411 = vunpack.c.l.b16 %v315
        %v412 = vunpack.c.l.b16 %v316
        %v413 = vunpack.c.l.b16 %v317
        %v414 = vunpack.c.l.b16 %v318
        %v415 = vunpack.c.l.b16 %v319
        %v416 = vunpack.c.l.b16 %v320
        %v417 = vunpack.c.l.b16 %v321
        %v418 = vunpack.c.l.b16 %v322
        %v419 = vunpack.c.l.b16 %v323
        %v420 = vunpack.c.l.b16 %v324
        %v421 = vpack.c.b16 %v406, %v405
        %v422 = vpack.c.b16 %v408, %v407
        %v423 = vpack.c.b16 %v410, %v409
        %v424 = vpack.c.b16 %v412, %v411
        %v425 = vpack.c.b16 %v414, %v413
        %v426 = vpack.c.b16 %v416, %v415
        %v427 = vpack.c.b16 %v418, %v417
        %v428 = vpack.c.b16 %v420, %v419
        %v469 = vunpack.c.l.b16 %v357
        %v470 = vunpack.c.h.b16 %v357
        %v471 = vunpack.c.l.b16 %v358
        %v472 = vunpack.c.h.b16 %v358
        %v473 = vunpack.c.l.b16 %v359
        %v474 = vunpack.c.h.b16 %v359
        %v475 = vunpack.c.l.b16 %v360
        %v476 = vunpack.c.h.b16 %v360
        %v477 = vunpack.c.l.b16 %v361
        %v478 = vunpack.c.h.b16 %v361
        %v479 = vunpack.c.l.b16 %v362
        %v480 = vunpack.c.h.b16 %v362
        %v481 = vunpack.c.l.b16 %v363
        %v482 = vunpack.c.h.b16 %v363
        %v483 = vunpack.c.l.b16 %v364
        %v484 = vunpack.c.h.b16 %v364
        %v485 = vunpack.c.l.b16 %v365
        %v486 = vunpack.c.h.b16 %v365
        %v487 = vunpack.c.l.b16 %v366
        %v488 = vunpack.c.h.b16 %v366
        %v489 = vunpack.c.l.b16 %v367
        %v490 = vunpack.c.h.b16 %v367
        %v491 = vunpack.c.l.b16 %v368
        %v492 = vunpack.c.h.b16 %v368
        %v493 = vunpack.c.l.b16 %v369
        %v494 = vunpack.c.h.b16 %v369
        %v495 = vunpack.c.l.b16 %v370
        %v496 = vunpack.c.h.b16 %v370
        %v497 = vunpack.c.l.b16 %v371
        %v498 = vunpack.c.h.b16 %v371
        %v499 = vunpack.c.l.b16 %v372
        %v500 = vunpack.c.h.b16 %v372
        %v501 = vunpack.c.l.b16 %v373
        %v502 = vunpack.c.h.b16 %v373
        %v503 = vunpack.c.l.b16 %v374
        %v504 = vunpack.c.h.b16 %v374
        %v505 = vunpack.c.l.b16 %v375
        %v506 = vunpack.c.h.b16 %v375
        %v507 = vunpack.c.l.b16 %v376
        %v508 = vunpack.c.h.b16 %v376
        %v509 = vunpack.c.l.b16 %v377
        %v510 = vunpack.c.h.b16 %v377
        %v511 = vunpack.c.l.b16 %v378
        %v512 = vunpack.c.h.b16 %v378
        %v513 = vunpack.c.l.b16 %v379
        %v514 = vunpack.c.h.b16 %v379
        %v515 = vunpack.c.l.b16 %v380
        %v516 = vunpack.c.h.b16 %v380
        %v517 = vunpack.c.l.b16 %v381
        %v518 = vunpack.c.h.b16 %v381
        %v519 = vunpack.c.l.b16 %v382
        %v520 = vunpack.c.h.b16 %v382
        %v521 = vunpack.c.l.b16 %v383
        %v522 = vunpack.c.h.b16 %v383
        %v523 = vunpack.c.l.b16 %v384
        %v524 = vunpack.c.h.b16 %v384
        %v525 = vunpack.c.l.b16 %v385
        %v526 = vunpack.c.h.b16 %v385
        %v527 = vunpack.c.l.b16 %v386
        %v528 = vunpack.c.h.b16 %v386
        %v529 = vunpack.c.l.b16 %v387
        %v530 = vunpack.c.h.b16 %v387
        %v531 = vunpack.c.l.b16 %v388
        %v532 = vunpack.c.h.b16 %v388
        %v533 = vpack.c.b16 %v473, %v469
        %v534 = vpack.c.b16 %v474, %v470
        %v535 = vpack.c.b16 %v475, %v471
        %v536 = vpack.c.b16 %v476, %v472
        %v537 = vpack.c.b16 %v481, %v477
        %v538 = vpack.c.b16 %v482, %v478
        %v539 = vpack.c.b16 %v483, %v479
        %v540 = vpack.c.b16 %v484, %v480
        %v541 = vpack.c.b16 %v489, %v485
        %v542 = vpack.c.b16 %v490, %v486
        %v543 = vpack.c.b16 %v491, %v487
        %v544 = vpack.c.b16 %v492, %v488
        %v545 = vpack.c.b16 %v497, %v493
        %v546 = vpack.c.b16 %v498, %v494
        %v547 = vpack.c.b16 %v499, %v495
        %v548 = vpack.c.b16 %v500, %v496
        %v549 = vpack.c.b16 %v505, %v501
        %v550 = vpack.c.b16 %v506, %v502
        %v551 = vpack.c.b16 %v507, %v503
        %v552 = vpack.c.b16 %v508, %v504
        %v553 = vpack.c.b16 %v513, %v509
        %v554 = vpack.c.b16 %v514, %v510
        %v555 = vpack.c.b16 %v515, %v511
        %v556 = vpack.c.b16 %v516, %v512
        %v557 = vpack.c.b16 %v521, %v517
        %v558 = vpack.c.b16 %v522, %v518
        %v559 = vpack.c.b16 %v523, %v519
        %v560 = vpack.c.b16 %v524, %v520
        %v561 = vpack.c.b16 %v529, %v525
        %v562 = vpack.c.b16 %v530, %v526
        %v563 = vpack.c.b16 %v531, %v527
        %v564 = vpack.c.b16 %v532, %v528
        %597 = vmatprep.subr.bf16.mxu0 %v562
        %598 = vmatpush1.bf16.msra.mxu0 %v561
        %599 = vmatprep.subr.bf16.mxu0 %v558
        %600 = vmatpush1.bf16.msra.mxu0 %v557
        %601 = vmatprep.subr.bf16.mxu0 %v554
        %602 = vmatpush1.bf16.msra.mxu0 %v553
        %603 = vmatprep.subr.bf16.mxu0 %v550
        %604 = vmatpush1.bf16.msra.mxu0 %v549
        %605 = vmatprep.subr.bf16.mxu0 %v546
        %606 = vmatpush1.bf16.msra.mxu0 %v545
        %607 = vmatprep.subr.bf16.mxu0 %v542
        %608 = vmatpush1.bf16.msra.mxu0 %v541
        %609 = vmatprep.subr.bf16.mxu0 %v538
        %610 = vmatpush1.bf16.msra.mxu0 %v537
        %611 = vmatprep.subr.bf16.mxu0 %v534
        %612 = vmatpush1.bf16.msra.mxu0 %v533
        %613 = vmatprep.subr.bf16.mxu0 0
        %614 = vmatpush2.bf16.msra.mxu0 0
        %615 = vmatprep.subr.bf16.mxu0 0
        %616 = vmatpush2.bf16.msra.mxu0 0
        %617 = vmatprep.subr.bf16.mxu0 0
        %618 = vmatpush2.bf16.msra.mxu0 0
        %619 = vmatprep.subr.bf16.mxu0 0
        %620 = vmatpush2.bf16.msra.mxu0 0
        %621 = vmatprep.subr.bf16.mxu0 0
        %622 = vmatpush2.bf16.msra.mxu0 0
        %623 = vmatprep.subr.bf16.mxu0 0
        %624 = vmatpush2.bf16.msra.mxu0 0
        %625 = vmatprep.subr.bf16.mxu0 0
        %626 = vmatpush2.bf16.msra.mxu0 0
        %627 = vmatprep.subr.bf16.mxu0 0
        %628 = vmatpush2.bf16.msra.mxu0 0
        %629 = vmatprep.mubr.bf16.mxu0 0
        %630 = vmatmul.mubr.bf16.gmra.mxu0 %v421
        %v631 = vpop.f32.mrf.mxu0
        %v632 = vadd.f32 0.0, %v631
        %v633 = vpop.f32.mrf.mxu0
        %v634 = vadd.f32 0.0, %v633
        %v635 = vpop.f32.mrf.mxu0
        %v636 = vadd.f32 0.0, %v635
        %v637 = vpop.f32.mrf.mxu0
        %v638 = vadd.f32 0.0, %v637
        %639 = vmatprep.mubr.bf16.mxu0 0
        %640 = vmatmul.mubr.bf16.gmra.mxu0 %v422
        %v641 = vpop.f32.mrf.mxu0
        %v642 = vadd.f32 0.0, %v641
        %v643 = vpop.f32.mrf.mxu0
        %v644 = vadd.f32 0.0, %v643
        %v645 = vpop.f32.mrf.mxu0
        %v646 = vadd.f32 0.0, %v645
        %v647 = vpop.f32.mrf.mxu0
        %v648 = vadd.f32 0.0, %v647
        %649 = vmatprep.mubr.bf16.mxu0 0
        %650 = vmatmul.mubr.bf16.gmra.mxu0 %v423
        %v651 = vpop.f32.mrf.mxu0
        %v652 = vadd.f32 0.0, %v651
        %v653 = vpop.f32.mrf.mxu0
        %v654 = vadd.f32 0.0, %v653
        %v655 = vpop.f32.mrf.mxu0
        %v656 = vadd.f32 0.0, %v655
        %v657 = vpop.f32.mrf.mxu0
        %v658 = vadd.f32 0.0, %v657
        %659 = vmatprep.mubr.bf16.mxu0 0
        %660 = vmatmul.mubr.bf16.gmra.mxu0 %v424
        %v661 = vpop.f32.mrf.mxu0
        %v662 = vadd.f32 0.0, %v661
        %v663 = vpop.f32.mrf.mxu0
        %v664 = vadd.f32 0.0, %v663
        %v665 = vpop.f32.mrf.mxu0
        %v666 = vadd.f32 0.0, %v665
        %v667 = vpop.f32.mrf.mxu0
        %v668 = vadd.f32 0.0, %v667
        %669 = vmatprep.mubr.bf16.mxu0 0
        %670 = vmatmul.mubr.bf16.gmra.mxu0 %v425
        %v671 = vpop.f32.mrf.mxu0
        %v672 = vadd.f32 0.0, %v671
        %v673 = vpop.f32.mrf.mxu0
        %v674 = vadd.f32 0.0, %v673
        %v675 = vpop.f32.mrf.mxu0
        %v676 = vadd.f32 0.0, %v675
        %v677 = vpop.f32.mrf.mxu0
        %v678 = vadd.f32 0.0, %v677
        %679 = vmatprep.mubr.bf16.mxu0 0
        %680 = vmatmul.mubr.bf16.gmra.mxu0 %v426
        %v681 = vpop.f32.mrf.mxu0
        %v682 = vadd.f32 0.0, %v681
        %v683 = vpop.f32.mrf.mxu0
        %v684 = vadd.f32 0.0, %v683
        %v685 = vpop.f32.mrf.mxu0
        %v686 = vadd.f32 0.0, %v685
        %v687 = vpop.f32.mrf.mxu0
        %v688 = vadd.f32 0.0, %v687
        %689 = vmatprep.mubr.bf16.mxu0 0
        %690 = vmatmul.mubr.bf16.gmra.mxu0 %v427
        %v691 = vpop.f32.mrf.mxu0
        %v692 = vadd.f32 0.0, %v691
        %v693 = vpop.f32.mrf.mxu0
        %v694 = vadd.f32 0.0, %v693
        %v695 = vpop.f32.mrf.mxu0
        %v696 = vadd.f32 0.0, %v695
        %v697 = vpop.f32.mrf.mxu0
        %v698 = vadd.f32 0.0, %v697
        %699 = vmatprep.mubr.bf16.mxu0 0
        %700 = vmatmul.mubr.bf16.gmra.mxu0 %v428
        %v701 = vpop.f32.mrf.mxu0
        %v702 = vadd.f32 0.0, %v701
        %v703 = vpop.f32.mrf.mxu0
        %v704 = vadd.f32 0.0, %v703
        %v705 = vpop.f32.mrf.mxu0
        %v706 = vadd.f32 0.0, %v705
        %v707 = vpop.f32.mrf.mxu0
        %v708 = vadd.f32 0.0, %v707
        %709 = vdwg.mxu0
        %710 = vmatprep.subr.bf16.mxu0 %v564
        %711 = vmatpush1.bf16.msra.mxu0 %v563
        %712 = vmatprep.subr.bf16.mxu0 %v560
        %713 = vmatpush1.bf16.msra.mxu0 %v559
        %714 = vmatprep.subr.bf16.mxu0 %v556
        %715 = vmatpush1.bf16.msra.mxu0 %v555
        %716 = vmatprep.subr.bf16.mxu0 %v552
        %717 = vmatpush1.bf16.msra.mxu0 %v551
        %718 = vmatprep.subr.bf16.mxu0 %v548
        %719 = vmatpush1.bf16.msra.mxu0 %v547
        %720 = vmatprep.subr.bf16.mxu0 %v544
        %721 = vmatpush1.bf16.msra.mxu0 %v543
        %722 = vmatprep.subr.bf16.mxu0 %v540
        %723 = vmatpush1.bf16.msra.mxu0 %v539
        %724 = vmatprep.subr.bf16.mxu0 %v536
        %725 = vmatpush1.bf16.msra.mxu0 %v535
        %726 = vmatprep.subr.bf16.mxu0 0
        %727 = vmatpush2.bf16.msra.mxu0 0
        %728 = vmatprep.subr.bf16.mxu0 0
        %729 = vmatpush2.bf16.msra.mxu0 0
        %730 = vmatprep.subr.bf16.mxu0 0
        %731 = vmatpush2.bf16.msra.mxu0 0
        %732 = vmatprep.subr.bf16.mxu0 0
        %733 = vmatpush2.bf16.msra.mxu0 0
        %734 = vmatprep.subr.bf16.mxu0 0
        %735 = vmatpush2.bf16.msra.mxu0 0
        %736 = vmatprep.subr.bf16.mxu0 0
        %737 = vmatpush2.bf16.msra.mxu0 0
        %738 = vmatprep.subr.bf16.mxu0 0
        %739 = vmatpush2.bf16.msra.mxu0 0
        %740 = vmatprep.subr.bf16.mxu0 0
        %741 = vmatpush2.bf16.msra.mxu0 0
        %742 = vmatprep.mubr.bf16.mxu0 0
        %743 = vmatmul.mubr.bf16.gmra.mxu0 %v421
        %v744 = vpop.f32.mrf.mxu0
        %v745 = vadd.f32 0.0, %v744
        %v746 = vpop.f32.mrf.mxu0
        %v747 = vadd.f32 0.0, %v746
        %v748 = vpop.f32.mrf.mxu0
        %v749 = vadd.f32 0.0, %v748
        %v750 = vpop.f32.mrf.mxu0
        %v751 = vadd.f32 0.0, %v750
        %752 = vmatprep.mubr.bf16.mxu0 0
        %753 = vmatmul.mubr.bf16.gmra.mxu0 %v422
        %v754 = vpop.f32.mrf.mxu0
        %v755 = vadd.f32 0.0, %v754
        %v756 = vpop.f32.mrf.mxu0
        %v757 = vadd.f32 0.0, %v756
        %v758 = vpop.f32.mrf.mxu0
        %v759 = vadd.f32 0.0, %v758
        %v760 = vpop.f32.mrf.mxu0
        %v761 = vadd.f32 0.0, %v760
        %762 = vmatprep.mubr.bf16.mxu0 0
        %763 = vmatmul.mubr.bf16.gmra.mxu0 %v423
        %v764 = vpop.f32.mrf.mxu0
        %v765 = vadd.f32 0.0, %v764
        %v766 = vpop.f32.mrf.mxu0
        %v767 = vadd.f32 0.0, %v766
        %v768 = vpop.f32.mrf.mxu0
        %v769 = vadd.f32 0.0, %v768
        %v770 = vpop.f32.mrf.mxu0
        %v771 = vadd.f32 0.0, %v770
        %772 = vmatprep.mubr.bf16.mxu0 0
        %773 = vmatmul.mubr.bf16.gmra.mxu0 %v424
        %v774 = vpop.f32.mrf.mxu0
        %v775 = vadd.f32 0.0, %v774
        %v776 = vpop.f32.mrf.mxu0
        %v777 = vadd.f32 0.0, %v776
        %v778 = vpop.f32.mrf.mxu0
        %v779 = vadd.f32 0.0, %v778
        %v780 = vpop.f32.mrf.mxu0
        %v781 = vadd.f32 0.0, %v780
        %782 = vmatprep.mubr.bf16.mxu0 0
        %783 = vmatmul.mubr.bf16.gmra.mxu0 %v425
        %v784 = vpop.f32.mrf.mxu0
        %v785 = vadd.f32 0.0, %v784
        %v786 = vpop.f32.mrf.mxu0
        %v787 = vadd.f32 0.0, %v786
        %v788 = vpop.f32.mrf.mxu0
        %v789 = vadd.f32 0.0, %v788
        %v790 = vpop.f32.mrf.mxu0
        %v791 = vadd.f32 0.0, %v790
        %792 = vmatprep.mubr.bf16.mxu0 0
        %793 = vmatmul.mubr.bf16.gmra.mxu0 %v426
        %v794 = vpop.f32.mrf.mxu0
        %v795 = vadd.f32 0.0, %v794
        %v796 = vpop.f32.mrf.mxu0
        %v797 = vadd.f32 0.0, %v796
        %v798 = vpop.f32.mrf.mxu0
        %v799 = vadd.f32 0.0, %v798
        %v800 = vpop.f32.mrf.mxu0
        %v801 = vadd.f32 0.0, %v800
        %802 = vmatprep.mubr.bf16.mxu0 0
        %803 = vmatmul.mubr.bf16.gmra.mxu0 %v427
        %v804 = vpop.f32.mrf.mxu0
        %v805 = vadd.f32 0.0, %v804
        %v806 = vpop.f32.mrf.mxu0
        %v807 = vadd.f32 0.0, %v806
        %v808 = vpop.f32.mrf.mxu0
        %v809 = vadd.f32 0.0, %v808
        %v810 = vpop.f32.mrf.mxu0
        %v811 = vadd.f32 0.0, %v810
        %812 = vmatprep.mubr.bf16.mxu0 0
        %813 = vmatmul.mubr.bf16.gmra.mxu0 %v428
        %v814 = vpop.f32.mrf.mxu0
        %v815 = vadd.f32 0.0, %v814
        %v816 = vpop.f32.mrf.mxu0
        %v817 = vadd.f32 0.0, %v816
        %v818 = vpop.f32.mrf.mxu0
        %v819 = vadd.f32 0.0, %v818
        %v820 = vpop.f32.mrf.mxu0
        %v821 = vadd.f32 0.0, %v820
        %822 = vdwg.mxu0
        %v823 = vpack.c.bf16 %v636, %v632
        %v824 = vpack.c.bf16 %v638, %v634
        %v825 = vpack.c.bf16 %v749, %v745
        %v826 = vpack.c.bf16 %v751, %v747
        %v827 = vpack.c.bf16 %v646, %v642
        %v828 = vpack.c.bf16 %v648, %v644
        %v829 = vpack.c.bf16 %v759, %v755
        %v830 = vpack.c.bf16 %v761, %v757
        %v831 = vpack.c.bf16 %v656, %v652
        %v832 = vpack.c.bf16 %v658, %v654
        %v833 = vpack.c.bf16 %v769, %v765
        %v834 = vpack.c.bf16 %v771, %v767
        %v835 = vpack.c.bf16 %v666, %v662
        %v836 = vpack.c.bf16 %v668, %v664
        %v837 = vpack.c.bf16 %v779, %v775
        %v838 = vpack.c.bf16 %v781, %v777
        %v839 = vpack.c.bf16 %v676, %v672
        %v840 = vpack.c.bf16 %v678, %v674
        %v841 = vpack.c.bf16 %v789, %v785
        %v842 = vpack.c.bf16 %v791, %v787
        %v843 = vpack.c.bf16 %v686, %v682
        %v844 = vpack.c.bf16 %v688, %v684
        %v845 = vpack.c.bf16 %v799, %v795
        %v846 = vpack.c.bf16 %v801, %v797
        %v847 = vpack.c.bf16 %v696, %v692
        %v848 = vpack.c.bf16 %v698, %v694
        %v849 = vpack.c.bf16 %v809, %v805
        %v850 = vpack.c.bf16 %v811, %v807
        %v851 = vpack.c.bf16 %v706, %v702
        %v852 = vpack.c.bf16 %v708, %v704
        %v853 = vpack.c.bf16 %v819, %v815
        %v854 = vpack.c.bf16 %v821, %v817
        %v871 = vunpack.c.l.b16 %v325
        %v872 = vunpack.c.l.b16 %v326
        %v873 = vunpack.c.l.b16 %v327
        %v874 = vunpack.c.l.b16 %v328
        %v875 = vunpack.c.l.b16 %v329
        %v876 = vunpack.c.l.b16 %v330
        %v877 = vunpack.c.l.b16 %v331
        %v878 = vunpack.c.l.b16 %v332
        %v879 = vunpack.c.l.b16 %v333
        %v880 = vunpack.c.l.b16 %v334
        %v881 = vunpack.c.l.b16 %v335
        %v882 = vunpack.c.l.b16 %v336
        %v883 = vunpack.c.l.b16 %v337
        %v884 = vunpack.c.l.b16 %v338
        %v885 = vunpack.c.l.b16 %v339
        %v886 = vunpack.c.l.b16 %v340
        %v887 = vpack.c.b16 %v872, %v871
        %v888 = vpack.c.b16 %v874, %v873
        %v889 = vpack.c.b16 %v876, %v875
        %v890 = vpack.c.b16 %v878, %v877
        %v891 = vpack.c.b16 %v880, %v879
        %v892 = vpack.c.b16 %v882, %v881
        %v893 = vpack.c.b16 %v884, %v883
        %v894 = vpack.c.b16 %v886, %v885
        %903 = vmatprep.subr.bf16.mxu0 0
        %904 = vmatpush1.bf16.msra.mxu0 %v894
        %905 = vmatprep.subr.bf16.mxu0 0
        %906 = vmatpush1.bf16.msra.mxu0 %v893
        %907 = vmatprep.subr.bf16.mxu0 0
        %908 = vmatpush1.bf16.msra.mxu0 %v892
        %909 = vmatprep.subr.bf16.mxu0 0
        %910 = vmatpush1.bf16.msra.mxu0 %v891
        %911 = vmatprep.subr.bf16.mxu0 0
        %912 = vmatpush1.bf16.msra.mxu0 %v890
        %913 = vmatprep.subr.bf16.mxu0 0
        %914 = vmatpush1.bf16.msra.mxu0 %v889
        %915 = vmatprep.subr.bf16.mxu0 0
        %916 = vmatpush1.bf16.msra.mxu0 %v888
        %917 = vmatprep.subr.bf16.mxu0 0
        %918 = vmatpush1.bf16.msra.mxu0 %v887
        %919 = vmatprep.subr.bf16.mxu0 0
        %920 = vmatpush2.bf16.msra.mxu0 0
        %921 = vmatprep.subr.bf16.mxu0 0
        %922 = vmatpush2.bf16.msra.mxu0 0
        %923 = vmatprep.subr.bf16.mxu0 0
        %924 = vmatpush2.bf16.msra.mxu0 0
        %925 = vmatprep.subr.bf16.mxu0 0
        %926 = vmatpush2.bf16.msra.mxu0 0
        %927 = vmatprep.subr.bf16.mxu0 0
        %928 = vmatpush2.bf16.msra.mxu0 0
        %929 = vmatprep.subr.bf16.mxu0 0
        %930 = vmatpush2.bf16.msra.mxu0 0
        %931 = vmatprep.subr.bf16.mxu0 0
        %932 = vmatpush2.bf16.msra.mxu0 0
        %933 = vmatprep.subr.bf16.mxu0 0
        %934 = vmatpush2.bf16.msra.mxu0 0
        %935 = vmatprep.mubr.bf16.mxu0 0
        %936 = vmatmul.mubr.bf16.gmra.mxu0 %v823
        %v937 = vpop.f32.mrf.mxu0
        %v938 = vadd.f32 %v341, %v937
        %v939 = vpop.f32.mrf.mxu0
        %v940 = vpop.f32.mrf.mxu0
        %v941 = vadd.f32 %v342, %v940
        %v942 = vpop.f32.mrf.mxu0
        %943 = vmatprep.mubr.bf16.mxu0 0
        %944 = vmatmul.mubr.bf16.gmra.mxu0 %v827
        %v945 = vpop.f32.mrf.mxu0
        %v946 = vadd.f32 %v343, %v945
        %v947 = vpop.f32.mrf.mxu0
        %v948 = vpop.f32.mrf.mxu0
        %v949 = vadd.f32 %v344, %v948
        %v950 = vpop.f32.mrf.mxu0
        %951 = vmatprep.mubr.bf16.mxu0 0
        %952 = vmatmul.mubr.bf16.gmra.mxu0 %v831
        %v953 = vpop.f32.mrf.mxu0
        %v954 = vadd.f32 %v345, %v953
        %v955 = vpop.f32.mrf.mxu0
        %v956 = vpop.f32.mrf.mxu0
        %v957 = vadd.f32 %v346, %v956
        %v958 = vpop.f32.mrf.mxu0
        %959 = vmatprep.mubr.bf16.mxu0 0
        %960 = vmatmul.mubr.bf16.gmra.mxu0 %v835
        %v961 = vpop.f32.mrf.mxu0
        %v962 = vadd.f32 %v347, %v961
        %v963 = vpop.f32.mrf.mxu0
        %v964 = vpop.f32.mrf.mxu0
        %v965 = vadd.f32 %v348, %v964
        %v966 = vpop.f32.mrf.mxu0
        %967 = vmatprep.mubr.bf16.mxu0 0
        %968 = vmatmul.mubr.bf16.gmra.mxu0 %v839
        %v969 = vpop.f32.mrf.mxu0
        %v970 = vadd.f32 %v349, %v969
        %v971 = vpop.f32.mrf.mxu0
        %v972 = vpop.f32.mrf.mxu0
        %v973 = vadd.f32 %v350, %v972
        %v974 = vpop.f32.mrf.mxu0
        %975 = vmatprep.mubr.bf16.mxu0 0
        %976 = vmatmul.mubr.bf16.gmra.mxu0 %v843
        %v977 = vpop.f32.mrf.mxu0
        %v978 = vadd.f32 %v351, %v977
        %v979 = vpop.f32.mrf.mxu0
        %v980 = vpop.f32.mrf.mxu0
        %v981 = vadd.f32 %v352, %v980
        %v982 = vpop.f32.mrf.mxu0
        %983 = vmatprep.mubr.bf16.mxu0 0
        %984 = vmatmul.mubr.bf16.gmra.mxu0 %v847
        %v985 = vpop.f32.mrf.mxu0
        %v986 = vadd.f32 %v353, %v985
        %v987 = vpop.f32.mrf.mxu0
        %v988 = vpop.f32.mrf.mxu0
        %v989 = vadd.f32 %v354, %v988
        %v990 = vpop.f32.mrf.mxu0
        %991 = vmatprep.mubr.bf16.mxu0 0
        %992 = vmatmul.mubr.bf16.gmra.mxu0 %v851
        %v993 = vpop.f32.mrf.mxu0
        %v994 = vadd.f32 %v355, %v993
        %v995 = vpop.f32.mrf.mxu0
        %v996 = vpop.f32.mrf.mxu0
        %v997 = vadd.f32 %v356, %v996
        %v998 = vpop.f32.mrf.mxu0
        %999 = vdwg.mxu0
        %1000 = vst [vmem:[%s306] sm:$0xff] %v938
        %1001 = vst [vmem:[%s306 + $0x8] sm:$0xff] %v941
        %1002 = vst [vmem:[%s306 + $0x10] sm:$0xff] %v946
        %1003 = vst [vmem:[%s306 + $0x18] sm:$0xff] %v949
        %1004 = vst [vmem:[%s306 + $0x20] sm:$0xff] %v954
        %1005 = vst [vmem:[%s306 + $0x28] sm:$0xff] %v957
        %1006 = vst [vmem:[%s306 + $0x30] sm:$0xff] %v962
        %1007 = vst [vmem:[%s306 + $0x38] sm:$0xff] %v965
        %1008 = vst [vmem:[%s306 + $0x40] sm:$0xff] %v970
        %1009 = vst [vmem:[%s306 + $0x48] sm:$0xff] %v973
        %1010 = vst [vmem:[%s306 + $0x50] sm:$0xff] %v978
        %1011 = vst [vmem:[%s306 + $0x58] sm:$0xff] %v981
        %1012 = vst [vmem:[%s306 + $0x60] sm:$0xff] %v986
        %1013 = vst [vmem:[%s306 + $0x68] sm:$0xff] %v989
        %1014 = vst [vmem:[%s306 + $0x70] sm:$0xff] %v994
        %1015 = vst [vmem:[%s306 + $0x78] sm:$0xff] %v997
        %1016 = vmatprep.subr.bf16.mxu0 0
        %1017 = vmatpush1.bf16.msra.mxu0 %v894
        %1018 = vmatprep.subr.bf16.mxu0 0
        %1019 = vmatpush1.bf16.msra.mxu0 %v893
        %1020 = vmatprep.subr.bf16.mxu0 0
        %1021 = vmatpush1.bf16.msra.mxu0 %v892
        %1022 = vmatprep.subr.bf16.mxu0 0
        %1023 = vmatpush1.bf16.msra.mxu0 %v891
        %1024 = vmatprep.subr.bf16.mxu0 0
        %1025 = vmatpush1.bf16.msra.mxu0 %v890
        %1026 = vmatprep.subr.bf16.mxu0 0
        %1027 = vmatpush1.bf16.msra.mxu0 %v889
        %1028 = vmatprep.subr.bf16.mxu0 0
        %1029 = vmatpush1.bf16.msra.mxu0 %v888
        %1030 = vmatprep.subr.bf16.mxu0 0
        %1031 = vmatpush1.bf16.msra.mxu0 %v887
        %1032 = vmatprep.subr.bf16.mxu0 0
        %1033 = vmatpush2.bf16.msra.mxu0 0
        %1034 = vmatprep.subr.bf16.mxu0 0
        %1035 = vmatpush2.bf16.msra.mxu0 0
        %1036 = vmatprep.subr.bf16.mxu0 0
        %1037 = vmatpush2.bf16.msra.mxu0 0
        %1038 = vmatprep.subr.bf16.mxu0 0
        %1039 = vmatpush2.bf16.msra.mxu0 0
        %1040 = vmatprep.subr.bf16.mxu0 0
        %1041 = vmatpush2.bf16.msra.mxu0 0
        %1042 = vmatprep.subr.bf16.mxu0 0
        %1043 = vmatpush2.bf16.msra.mxu0 0
        %1044 = vmatprep.subr.bf16.mxu0 0
        %1045 = vmatpush2.bf16.msra.mxu0 0
        %1046 = vmatprep.subr.bf16.mxu0 0
        %1047 = vmatpush2.bf16.msra.mxu0 0
        %1048 = vmatprep.mubr.bf16.mxu0 0
        %1049 = vmatmul.mubr.bf16.gmra.mxu0 %v824
        %v1050 = vpop.f32.mrf.mxu0
        %v1051 = vadd.f32 %v341, %v1050
        %v1052 = vpop.f32.mrf.mxu0
        %v1053 = vpop.f32.mrf.mxu0
        %v1054 = vadd.f32 %v342, %v1053
        %v1055 = vpop.f32.mrf.mxu0
        %1056 = vmatprep.mubr.bf16.mxu0 0
        %1057 = vmatmul.mubr.bf16.gmra.mxu0 %v828
        %v1058 = vpop.f32.mrf.mxu0
        %v1059 = vadd.f32 %v343, %v1058
        %v1060 = vpop.f32.mrf.mxu0
        %v1061 = vpop.f32.mrf.mxu0
        %v1062 = vadd.f32 %v344, %v1061
        %v1063 = vpop.f32.mrf.mxu0
        %1064 = vmatprep.mubr.bf16.mxu0 0
        %1065 = vmatmul.mubr.bf16.gmra.mxu0 %v832
        %v1066 = vpop.f32.mrf.mxu0
        %v1067 = vadd.f32 %v345, %v1066
        %v1068 = vpop.f32.mrf.mxu0
        %v1069 = vpop.f32.mrf.mxu0
        %v1070 = vadd.f32 %v346, %v1069
        %v1071 = vpop.f32.mrf.mxu0
        %1072 = vmatprep.mubr.bf16.mxu0 0
        %1073 = vmatmul.mubr.bf16.gmra.mxu0 %v836
        %v1074 = vpop.f32.mrf.mxu0
        %v1075 = vadd.f32 %v347, %v1074
        %v1076 = vpop.f32.mrf.mxu0
        %v1077 = vpop.f32.mrf.mxu0
        %v1078 = vadd.f32 %v348, %v1077
        %v1079 = vpop.f32.mrf.mxu0
        %1080 = vmatprep.mubr.bf16.mxu0 0
        %1081 = vmatmul.mubr.bf16.gmra.mxu0 %v840
        %v1082 = vpop.f32.mrf.mxu0
        %v1083 = vadd.f32 %v349, %v1082
        %v1084 = vpop.f32.mrf.mxu0
        %v1085 = vpop.f32.mrf.mxu0
        %v1086 = vadd.f32 %v350, %v1085
        %v1087 = vpop.f32.mrf.mxu0
        %1088 = vmatprep.mubr.bf16.mxu0 0
        %1089 = vmatmul.mubr.bf16.gmra.mxu0 %v844
        %v1090 = vpop.f32.mrf.mxu0
        %v1091 = vadd.f32 %v351, %v1090
        %v1092 = vpop.f32.mrf.mxu0
        %v1093 = vpop.f32.mrf.mxu0
        %v1094 = vadd.f32 %v352, %v1093
        %v1095 = vpop.f32.mrf.mxu0
        %1096 = vmatprep.mubr.bf16.mxu0 0
        %1097 = vmatmul.mubr.bf16.gmra.mxu0 %v848
        %v1098 = vpop.f32.mrf.mxu0
        %v1099 = vadd.f32 %v353, %v1098
        %v1100 = vpop.f32.mrf.mxu0
        %v1101 = vpop.f32.mrf.mxu0
        %v1102 = vadd.f32 %v354, %v1101
        %v1103 = vpop.f32.mrf.mxu0
        %1104 = vmatprep.mubr.bf16.mxu0 0
        %1105 = vmatmul.mubr.bf16.gmra.mxu0 %v852
        %v1106 = vpop.f32.mrf.mxu0
        %v1107 = vadd.f32 %v355, %v1106
        %v1108 = vpop.f32.mrf.mxu0
        %v1109 = vpop.f32.mrf.mxu0
        %v1110 = vadd.f32 %v356, %v1109
        %v1111 = vpop.f32.mrf.mxu0
        %1112 = vdwg.mxu0
        %s1113 = scalar_lea.vmem %s306, 128 [#allocation10]
        %1114 = vst [vmem:[%s1113] sm:$0xff] %v1051
        %1115 = vst [vmem:[%s1113 + $0x8] sm:$0xff] %v1054
        %1116 = vst [vmem:[%s1113 + $0x10] sm:$0xff] %v1059
        %1117 = vst [vmem:[%s1113 + $0x18] sm:$0xff] %v1062
        %1118 = vst [vmem:[%s1113 + $0x20] sm:$0xff] %v1067
        %1119 = vst [vmem:[%s1113 + $0x28] sm:$0xff] %v1070
        %1120 = vst [vmem:[%s1113 + $0x30] sm:$0xff] %v1075
        %1121 = vst [vmem:[%s1113 + $0x38] sm:$0xff] %v1078
        %1122 = vst [vmem:[%s1113 + $0x40] sm:$0xff] %v1083
        %1123 = vst [vmem:[%s1113 + $0x48] sm:$0xff] %v1086
        %1124 = vst [vmem:[%s1113 + $0x50] sm:$0xff] %v1091
        %1125 = vst [vmem:[%s1113 + $0x58] sm:$0xff] %v1094
        %1126 = vst [vmem:[%s1113 + $0x60] sm:$0xff] %v1099
        %1127 = vst [vmem:[%s1113 + $0x68] sm:$0xff] %v1102
        %1128 = vst [vmem:[%s1113 + $0x70] sm:$0xff] %v1107
        %1129 = vst [vmem:[%s1113 + $0x78] sm:$0xff] %v1110
        %1130 = vmatprep.subr.bf16.mxu0 0
        %1131 = vmatpush1.bf16.msra.mxu0 %v894
        %1132 = vmatprep.subr.bf16.mxu0 0
        %1133 = vmatpush1.bf16.msra.mxu0 %v893
        %1134 = vmatprep.subr.bf16.mxu0 0
        %1135 = vmatpush1.bf16.msra.mxu0 %v892
        %1136 = vmatprep.subr.bf16.mxu0 0
        %1137 = vmatpush1.bf16.msra.mxu0 %v891
        %1138 = vmatprep.subr.bf16.mxu0 0
        %1139 = vmatpush1.bf16.msra.mxu0 %v890
        %1140 = vmatprep.subr.bf16.mxu0 0
        %1141 = vmatpush1.bf16.msra.mxu0 %v889
        %1142 = vmatprep.subr.bf16.mxu0 0
        %1143 = vmatpush1.bf16.msra.mxu0 %v888
        %1144 = vmatprep.subr.bf16.mxu0 0
        %1145 = vmatpush1.bf16.msra.mxu0 %v887
        %1146 = vmatprep.subr.bf16.mxu0 0
        %1147 = vmatpush2.bf16.msra.mxu0 0
        %1148 = vmatprep.subr.bf16.mxu0 0
        %1149 = vmatpush2.bf16.msra.mxu0 0
        %1150 = vmatprep.subr.bf16.mxu0 0
        %1151 = vmatpush2.bf16.msra.mxu0 0
        %1152 = vmatprep.subr.bf16.mxu0 0
        %1153 = vmatpush2.bf16.msra.mxu0 0
        %1154 = vmatprep.subr.bf16.mxu0 0
        %1155 = vmatpush2.bf16.msra.mxu0 0
        %1156 = vmatprep.subr.bf16.mxu0 0
        %1157 = vmatpush2.bf16.msra.mxu0 0
        %1158 = vmatprep.subr.bf16.mxu0 0
        %1159 = vmatpush2.bf16.msra.mxu0 0
        %1160 = vmatprep.subr.bf16.mxu0 0
        %1161 = vmatpush2.bf16.msra.mxu0 0
        %1162 = vmatprep.mubr.bf16.mxu0 0
        %1163 = vmatmul.mubr.bf16.gmra.mxu0 %v825
        %v1164 = vpop.f32.mrf.mxu0
        %v1165 = vadd.f32 %v341, %v1164
        %v1166 = vpop.f32.mrf.mxu0
        %v1167 = vpop.f32.mrf.mxu0
        %v1168 = vadd.f32 %v342, %v1167
        %v1169 = vpop.f32.mrf.mxu0
        %1170 = vmatprep.mubr.bf16.mxu0 0
        %1171 = vmatmul.mubr.bf16.gmra.mxu0 %v829
        %v1172 = vpop.f32.mrf.mxu0
        %v1173 = vadd.f32 %v343, %v1172
        %v1174 = vpop.f32.mrf.mxu0
        %v1175 = vpop.f32.mrf.mxu0
        %v1176 = vadd.f32 %v344, %v1175
        %v1177 = vpop.f32.mrf.mxu0
        %1178 = vmatprep.mubr.bf16.mxu0 0
        %1179 = vmatmul.mubr.bf16.gmra.mxu0 %v833
        %v1180 = vpop.f32.mrf.mxu0
        %v1181 = vadd.f32 %v345, %v1180
        %v1182 = vpop.f32.mrf.mxu0
        %v1183 = vpop.f32.mrf.mxu0
        %v1184 = vadd.f32 %v346, %v1183
        %v1185 = vpop.f32.mrf.mxu0
        %1186 = vmatprep.mubr.bf16.mxu0 0
        %1187 = vmatmul.mubr.bf16.gmra.mxu0 %v837
        %v1188 = vpop.f32.mrf.mxu0
        %v1189 = vadd.f32 %v347, %v1188
        %v1190 = vpop.f32.mrf.mxu0
        %v1191 = vpop.f32.mrf.mxu0
        %v1192 = vadd.f32 %v348, %v1191
        %v1193 = vpop.f32.mrf.mxu0
        %1194 = vmatprep.mubr.bf16.mxu0 0
        %1195 = vmatmul.mubr.bf16.gmra.mxu0 %v841
        %v1196 = vpop.f32.mrf.mxu0
        %v1197 = vadd.f32 %v349, %v1196
        %v1198 = vpop.f32.mrf.mxu0
        %v1199 = vpop.f32.mrf.mxu0
        %v1200 = vadd.f32 %v350, %v1199
        %v1201 = vpop.f32.mrf.mxu0
        %1202 = vmatprep.mubr.bf16.mxu0 0
        %1203 = vmatmul.mubr.bf16.gmra.mxu0 %v845
        %v1204 = vpop.f32.mrf.mxu0
        %v1205 = vadd.f32 %v351, %v1204
        %v1206 = vpop.f32.mrf.mxu0
        %v1207 = vpop.f32.mrf.mxu0
        %v1208 = vadd.f32 %v352, %v1207
        %v1209 = vpop.f32.mrf.mxu0
        %1210 = vmatprep.mubr.bf16.mxu0 0
        %1211 = vmatmul.mubr.bf16.gmra.mxu0 %v849
        %v1212 = vpop.f32.mrf.mxu0
        %v1213 = vadd.f32 %v353, %v1212
        %v1214 = vpop.f32.mrf.mxu0
        %v1215 = vpop.f32.mrf.mxu0
        %v1216 = vadd.f32 %v354, %v1215
        %v1217 = vpop.f32.mrf.mxu0
        %1218 = vmatprep.mubr.bf16.mxu0 0
        %1219 = vmatmul.mubr.bf16.gmra.mxu0 %v853
        %v1220 = vpop.f32.mrf.mxu0
        %v1221 = vadd.f32 %v355, %v1220
        %v1222 = vpop.f32.mrf.mxu0
        %v1223 = vpop.f32.mrf.mxu0
        %v1224 = vadd.f32 %v356, %v1223
        %v1225 = vpop.f32.mrf.mxu0
        %1226 = vdwg.mxu0
        %s1227 = scalar_lea.vmem %s306, 256 [#allocation10]
        %1228 = vst [vmem:[%s1227] sm:$0xff] %v1165
        %1229 = vst [vmem:[%s1227 + $0x8] sm:$0xff] %v1168
        %1230 = vst [vmem:[%s1227 + $0x10] sm:$0xff] %v1173
        %1231 = vst [vmem:[%s1227 + $0x18] sm:$0xff] %v1176
        %1232 = vst [vmem:[%s1227 + $0x20] sm:$0xff] %v1181
        %1233 = vst [vmem:[%s1227 + $0x28] sm:$0xff] %v1184
        %1234 = vst [vmem:[%s1227 + $0x30] sm:$0xff] %v1189
        %1235 = vst [vmem:[%s1227 + $0x38] sm:$0xff] %v1192
        %1236 = vst [vmem:[%s1227 + $0x40] sm:$0xff] %v1197
        %1237 = vst [vmem:[%s1227 + $0x48] sm:$0xff] %v1200
        %1238 = vst [vmem:[%s1227 + $0x50] sm:$0xff] %v1205
        %1239 = vst [vmem:[%s1227 + $0x58] sm:$0xff] %v1208
        %1240 = vst [vmem:[%s1227 + $0x60] sm:$0xff] %v1213
        %1241 = vst [vmem:[%s1227 + $0x68] sm:$0xff] %v1216
        %1242 = vst [vmem:[%s1227 + $0x70] sm:$0xff] %v1221
        %1243 = vst [vmem:[%s1227 + $0x78] sm:$0xff] %v1224
        %1244 = vmatprep.subr.bf16.mxu0 0
        %1245 = vmatpush1.bf16.msra.mxu0 %v894
        %1246 = vmatprep.subr.bf16.mxu0 0
        %1247 = vmatpush1.bf16.msra.mxu0 %v893
        %1248 = vmatprep.subr.bf16.mxu0 0
        %1249 = vmatpush1.bf16.msra.mxu0 %v892
        %1250 = vmatprep.subr.bf16.mxu0 0
        %1251 = vmatpush1.bf16.msra.mxu0 %v891
        %1252 = vmatprep.subr.bf16.mxu0 0
        %1253 = vmatpush1.bf16.msra.mxu0 %v890
        %1254 = vmatprep.subr.bf16.mxu0 0
        %1255 = vmatpush1.bf16.msra.mxu0 %v889
        %1256 = vmatprep.subr.bf16.mxu0 0
        %1257 = vmatpush1.bf16.msra.mxu0 %v888
        %1258 = vmatprep.subr.bf16.mxu0 0
        %1259 = vmatpush1.bf16.msra.mxu0 %v887
        %1260 = vmatprep.subr.bf16.mxu0 0
        %1261 = vmatpush2.bf16.msra.mxu0 0
        %1262 = vmatprep.subr.bf16.mxu0 0
        %1263 = vmatpush2.bf16.msra.mxu0 0
        %1264 = vmatprep.subr.bf16.mxu0 0
        %1265 = vmatpush2.bf16.msra.mxu0 0
        %1266 = vmatprep.subr.bf16.mxu0 0
        %1267 = vmatpush2.bf16.msra.mxu0 0
        %1268 = vmatprep.subr.bf16.mxu0 0
        %1269 = vmatpush2.bf16.msra.mxu0 0
        %1270 = vmatprep.subr.bf16.mxu0 0
        %1271 = vmatpush2.bf16.msra.mxu0 0
        %1272 = vmatprep.subr.bf16.mxu0 0
        %1273 = vmatpush2.bf16.msra.mxu0 0
        %1274 = vmatprep.subr.bf16.mxu0 0
        %1275 = vmatpush2.bf16.msra.mxu0 0
        %1276 = vmatprep.mubr.bf16.mxu0 0
        %1277 = vmatmul.mubr.bf16.gmra.mxu0 %v826
        %v1278 = vpop.f32.mrf.mxu0
        %v1279 = vadd.f32 %v341, %v1278
        %v1280 = vpop.f32.mrf.mxu0
        %v1281 = vpop.f32.mrf.mxu0
        %v1282 = vadd.f32 %v342, %v1281
        %v1283 = vpop.f32.mrf.mxu0
        %1284 = vmatprep.mubr.bf16.mxu0 0
        %1285 = vmatmul.mubr.bf16.gmra.mxu0 %v830
        %v1286 = vpop.f32.mrf.mxu0
        %v1287 = vadd.f32 %v343, %v1286
        %v1288 = vpop.f32.mrf.mxu0
        %v1289 = vpop.f32.mrf.mxu0
        %v1290 = vadd.f32 %v344, %v1289
        %v1291 = vpop.f32.mrf.mxu0
        %1292 = vmatprep.mubr.bf16.mxu0 0
        %1293 = vmatmul.mubr.bf16.gmra.mxu0 %v834
        %v1294 = vpop.f32.mrf.mxu0
        %v1295 = vadd.f32 %v345, %v1294
        %v1296 = vpop.f32.mrf.mxu0
        %v1297 = vpop.f32.mrf.mxu0
        %v1298 = vadd.f32 %v346, %v1297
        %v1299 = vpop.f32.mrf.mxu0
        %1300 = vmatprep.mubr.bf16.mxu0 0
        %1301 = vmatmul.mubr.bf16.gmra.mxu0 %v838
        %v1302 = vpop.f32.mrf.mxu0
        %v1303 = vadd.f32 %v347, %v1302
        %v1304 = vpop.f32.mrf.mxu0
        %v1305 = vpop.f32.mrf.mxu0
        %v1306 = vadd.f32 %v348, %v1305
        %v1307 = vpop.f32.mrf.mxu0
        %1308 = vmatprep.mubr.bf16.mxu0 0
        %1309 = vmatmul.mubr.bf16.gmra.mxu0 %v842
        %v1310 = vpop.f32.mrf.mxu0
        %v1311 = vadd.f32 %v349, %v1310
        %v1312 = vpop.f32.mrf.mxu0
        %v1313 = vpop.f32.mrf.mxu0
        %v1314 = vadd.f32 %v350, %v1313
        %v1315 = vpop.f32.mrf.mxu0
        %1316 = vmatprep.mubr.bf16.mxu0 0
        %1317 = vmatmul.mubr.bf16.gmra.mxu0 %v846
        %v1318 = vpop.f32.mrf.mxu0
        %v1319 = vadd.f32 %v351, %v1318
        %v1320 = vpop.f32.mrf.mxu0
        %v1321 = vpop.f32.mrf.mxu0
        %v1322 = vadd.f32 %v352, %v1321
        %v1323 = vpop.f32.mrf.mxu0
        %1324 = vmatprep.mubr.bf16.mxu0 0
        %1325 = vmatmul.mubr.bf16.gmra.mxu0 %v850
        %v1326 = vpop.f32.mrf.mxu0
        %v1327 = vadd.f32 %v353, %v1326
        %v1328 = vpop.f32.mrf.mxu0
        %v1329 = vpop.f32.mrf.mxu0
        %v1330 = vadd.f32 %v354, %v1329
        %v1331 = vpop.f32.mrf.mxu0
        %1332 = vmatprep.mubr.bf16.mxu0 0
        %1333 = vmatmul.mubr.bf16.gmra.mxu0 %v854
        %v1334 = vpop.f32.mrf.mxu0
        %v1335 = vadd.f32 %v355, %v1334
        %v1336 = vpop.f32.mrf.mxu0
        %v1337 = vpop.f32.mrf.mxu0
        %v1338 = vadd.f32 %v356, %v1337
        %v1339 = vpop.f32.mrf.mxu0
        %1340 = vdwg.mxu0
        %s1341 = scalar_lea.vmem %s306, 384 [#allocation10]
        %1342 = vst [vmem:[%s1341] sm:$0xff] %v1279
        %1343 = vst [vmem:[%s1341 + $0x8] sm:$0xff] %v1282
        %1344 = vst [vmem:[%s1341 + $0x10] sm:$0xff] %v1287
        %1345 = vst [vmem:[%s1341 + $0x18] sm:$0xff] %v1290
        %1346 = vst [vmem:[%s1341 + $0x20] sm:$0xff] %v1295
        %1347 = vst [vmem:[%s1341 + $0x28] sm:$0xff] %v1298
        %1348 = vst [vmem:[%s1341 + $0x30] sm:$0xff] %v1303
        %1349 = vst [vmem:[%s1341 + $0x38] sm:$0xff] %v1306
        %1350 = vst [vmem:[%s1341 + $0x40] sm:$0xff] %v1311
        %1351 = vst [vmem:[%s1341 + $0x48] sm:$0xff] %v1314
        %1352 = vst [vmem:[%s1341 + $0x50] sm:$0xff] %v1319
        %1353 = vst [vmem:[%s1341 + $0x58] sm:$0xff] %v1322
        %1354 = vst [vmem:[%s1341 + $0x60] sm:$0xff] %v1327
        %1355 = vst [vmem:[%s1341 + $0x68] sm:$0xff] %v1330
        %1356 = vst [vmem:[%s1341 + $0x70] sm:$0xff] %v1335
        %1357 = vst [vmem:[%s1341 + $0x78] sm:$0xff] %v1338
        %s1358 = sand.u32 %s146, 1
        %s1359 = scalar_lea.sflag [#allocation4], %s1358
        %s1360 = sand.u32 %s146, 1
        %s1361 = smul.addr %s1360, 512
        %s1362 = scalar_lea.vmem [#allocation10], %s1361
        // Predicated region
        $region53: #{tpu_custom_call.1} parent=35 // pred_check
          %p1363 = pneg %p156
        $region54: #{tpu_custom_call.1} parent=35 // pred_check_branch
          %1365 = sbr.rel (%p1363) target = $region56
        $region55: #{tpu_custom_call.1} parent=35 // pred_region
          %s1366 = smul.u32 4, %s30
          %s1368 = ssub.s32 8192, 8192
          %1369 = vsyncadd %s1359, %s1368
          %s1370 = smul.addr %s1366, 16
          %s1371 = smul.addr %s29, 64
          %s1372 = sadd.s32 %s1370, %s1371
          %s1373 = smul.addr %s1372, 128
          %s1374 = scalar_lea.hbm %s4, %s1373
          %s1375 = sshll.u32 %s1362, 4
          %s1376 = int_to_ptr.vmem [resolvable:$true] %s1375
          %1381 = dma.vmem_to_hbm [thread:$0]  %s1376, 8192, %s1374, %s1359, 128, 128, 8
        $region56: #{tpu_custom_call.1} parent=35 // pred_fallthru
          _
      $region36: #{tpu_custom_call.1} parent=5 // pred_fallthru
        _
      %p1382 = scmp.le.s32.totalorder 2, %s20
      // Predicated region
      $region57: #{tpu_custom_call.1} parent=5 // pred_check
        %p1383 = pneg %p1382
      $region58: #{tpu_custom_call.1} parent=5 // pred_check_branch
        %1385 = sbr.rel (%p1383) target = $region60
      $region59: #{tpu_custom_call.1} parent=5 // pred_region
        %s1386 = ssub.s32 %s20, 2
        // Predicated region
        $region61: #{tpu_custom_call.1} parent=59 // pred_check
          %p1387 = pneg %p162
        $region62: #{tpu_custom_call.1} parent=59 // pred_check_branch
          %1389 = sbr.rel (%p1387) target = $region64
        $region63: #{tpu_custom_call.1} parent=59 // pred_region
          %s1390 = sand.u32 %s147, 1
          %s1391 = scalar_lea.sflag [#allocation4], %s1390
          %s1392 = sand.u32 %s147, 1
          %s1393 = smul.addr %s1392, 512
          %s1394 = scalar_lea.vmem [#allocation10], %s1393
          %1395 = dma.done %s1391, 8192
        $region64: #{tpu_custom_call.1} parent=59 // pred_fallthru
          _
      $region60: #{tpu_custom_call.1} parent=5 // pred_fallthru
        _
    $region6: #{tpu_custom_call.1} parent=1 // loop_footer
      %s24 = sadd.s32 1, %s20
    $region7: #{tpu_custom_call.1} parent=1 // loop_footer_branch
      %19 = sbr.rel target = $region3
    $region8: #{tpu_custom_call.1} parent=1 // loop_exit
      _
    %1396 = vsyncpa [#allocation3], 1
    %s1397 = scalar_lea.sflag [#allocation3], 1
    %1398 = vsyncpa %s1397, 1
    %1399 = vsyncpa [#allocation6], 1
    %s1400 = scalar_lea.sflag [#allocation6], 1
    %1401 = vsyncpa %s1400, 1
    %1402 = vsyncpa [#allocation9], 1
    %1403 = vsyncpa [#allocation4], 1
    %s1404 = scalar_lea.sflag [#allocation4], 1
    %1405 = vsyncpa %s1404, 1

</llo_original>
